<compile_context>
chip_gen: v7x
topology: tpu7x:2x2x1
jax: 0.10.0
libtpu: 0.0.40
codegen_flags: <defaults>
</compile_context>

<pallas_src>
import functools

import jax
import jax.numpy as jnp
from jax.experimental import pallas as pl
from jax.experimental.pallas import tpu as pltpu


def _attn_kernel(x_ref, w_ref, b_ref, out_ref, acc_ref, *, num_heads):
    """x_ref: (bb, L, D); w_ref: (D, 3D); b_ref: (1, 3D) f32;
    out_ref: (bb, L, D); acc_ref: (bb, L, D) f32 VMEM scratch."""
    bb, L, D = x_ref.shape
    H = num_heads
    hd = D // H
    cdt = x_ref.dtype                        # MXU operand dtype (bf16 or f32)

    # Fused QKV projection for the whole batch block: bb*L rows packed along
    # sublanes (fills the MXU M dimension), weights DMA'd once per grid step.
    # The softmax scale is already folded into the Q columns of w/b.
    x2 = x_ref[...].reshape(bb * L, D)
    qkv = jnp.dot(x2, w_ref[...],
                  preferred_element_type=jnp.float32) + b_ref[0]   # (bb*L,3D) f32

    for b in range(bb):                       # static unroll, bb is small
        qkv_b = qkv[b * L:(b + 1) * L]        # (L, 3D) f32, static slice
        for h in range(H):
            lo = h * hd
            # Slice first, cast per operand: avoids keeping a second
            # full-size (bb*L, 3D) low-precision copy live next to the f32
            # one (review item: early death of the f32 qkv buffer).
            q_h = qkv_b[:, lo:lo + hd].astype(cdt)                  # (L, hd)
            k_h = qkv_b[:, D + lo:D + lo + hd].astype(cdt)
            v_h = qkv_b[:, 2 * D + lo:2 * D + lo + hd].astype(cdt)

            # Scores (scale pre-folded into q); softmax statistics in f32.
            s = jnp.dot(q_h, k_h.T, preferred_element_type=jnp.float32)  # (L,L)
            m = jnp.max(s, axis=-1, keepdims=True)
            e = jnp.exp(s - m)                                           # (L,L) f32
            denom = jnp.sum(e, axis=-1, keepdims=True)                   # (L,1)

            # Deferred normalisation: PV matmul on the unnormalised exp, then
            # rescale only the small (L, hd) result (EUP approximate recip).
            o_h = jnp.dot(e.astype(cdt), v_h,
                          preferred_element_type=jnp.float32)            # (L,hd)
            acc_ref[b, :, lo:lo + hd] = o_h * pl.reciprocal(denom, approx=True)

    # Single lane-dense cast + store covering the full hidden dim.
    out_ref[...] = acc_ref[...].astype(out_ref.dtype)


def self_attention_pallas(x, w_qkv, b_qkv, num_heads, *,
                          mxu_dtype=None, batch_block=None):
    """x: (B, L, D); w_qkv: (3D, D) PyTorch nn.Linear weight; b_qkv: (3D,).

    mxu_dtype: optional dtype for the MXU operands (e.g. jnp.bfloat16 when x
      is float32); accumulation and softmax stay f32, output keeps x.dtype.
    batch_block: batch elements per grid step (default: the whole batch when
      the per-step working set is small, else 1).
    """
    B, L, D = x.shape
    H = num_heads
    assert D % H == 0, "dim must be divisible by num_heads"
    hd = D // H
    scale = float(hd) ** (-0.5)

    cdt = jnp.dtype(mxu_dtype) if mxu_dtype is not None else jnp.dtype(x.dtype)
    out_dtype = x.dtype

    # PyTorch Linear: y = x @ W^T + b  ->  fused weight of shape (D, 3D).
    # Fold the softmax scale into the Q projection (first D output columns):
    # (q*scale) @ k^T == scale * (q @ k^T).
    col_scale = jnp.concatenate([
        jnp.full((D,), scale, dtype=jnp.float32),
        jnp.ones((2 * D,), dtype=jnp.float32),
    ])
    w_fused = (jnp.transpose(w_qkv).astype(jnp.float32)
               * col_scale[None, :]).astype(cdt)                          # (D, 3D)
    b_fused = (b_qkv.astype(jnp.float32) * col_scale).reshape(1, 3 * D)   # f32
    x_in = x.astype(cdt)

    # Batch elements per grid step: fold the whole batch when the per-step
    # f32 working set (qkv + accumulator + score/exp temporaries) is small.
    if batch_block is None:
        per_b = L * 3 * D * 4 + L * D * 4 + 2 * L * L * 4
        batch_block = B if B * per_b <= (8 << 20) else 1
    bb = max(1, min(int(batch_block), B))
    while B % bb:
        bb -= 1

    cdt_sz = jnp.dtype(cdt).itemsize
    out_sz = jnp.dtype(out_dtype).itemsize

    # VMEM budget: double-buffered x/out blocks, double-buffered resident
    # weight + bias (constant index_map; budgeted at 2x per review), the f32
    # accumulator scratch, plus slack for the f32 qkv / score temporaries.
    vmem_need = (2 * bb * L * D * (cdt_sz + out_sz)          # x + out blocks
                 + 2 * (D * 3 * D * cdt_sz + 3 * D * 4)      # fused W + bias
                 + bb * L * D * 4                            # acc scratch
                 + bb * L * 3 * D * 4                        # qkv f32
                 + 4 * L * L * 4)                            # s / e temporaries
    vmem_limit = int(min(max(2 * vmem_need, 32 << 20), 100 << 20))

    cost = pl.CostEstimate(
        flops=2 * B * L * D * 3 * D + 4 * B * L * L * D,
        transcendentals=B * H * L * L,
        bytes_accessed=(B * L * D * cdt_sz + D * 3 * D * cdt_sz
                        + 3 * D * 4 + B * L * D * out_sz),
    )

    kernel = functools.partial(_attn_kernel, num_heads=H)

    out = pl.pallas_call(
        kernel,
        out_shape=jax.ShapeDtypeStruct((B, L, D), out_dtype),
        grid_spec=pltpu.PrefetchScalarGridSpec(
            num_scalar_prefetch=0,
            grid=(B // bb,),
            in_specs=[
                pl.BlockSpec((bb, L, D), lambda i: (i, 0, 0)),    # x block
                # TODO(synk): single-buffer the resident weight/bias
                # (pipeline_mode=pl.Buffered(1)); its 2x allocation is
                # budgeted in vmem_limit_bytes above instead.
                pl.BlockSpec((D, 3 * D), lambda i: (0, 0)),       # fused W_qkv
                pl.BlockSpec((1, 3 * D), lambda i: (0, 0)),       # fused bias (f32)
            ],
            out_specs=pl.BlockSpec((bb, L, D), lambda i: (i, 0, 0)),
            scratch_shapes=[pltpu.VMEM((bb, L, D), jnp.float32)],
        ),
        compiler_params=pltpu.CompilerParams(
            dimension_semantics=("parallel",),
            vmem_limit_bytes=vmem_limit,
        ),
        cost_estimate=cost,
    )(x_in, w_fused, b_fused)

    return out


def self_attention_ref(x, w_qkv, b_qkv, num_heads):
    """Pure-JAX reference mirroring the PyTorch forward (absolute pos. emb.)."""
    B, L, D = x.shape
    H = num_heads
    hd = D // H
    scale = float(hd) ** (-0.5)
    qkv = x @ w_qkv.T + b_qkv                                    # (B, L, 3D)
    qkv = qkv.reshape(B, L, 3, H, hd).transpose(2, 0, 3, 1, 4)   # (3, B, H, L, hd)
    q, k, v = qkv[0], qkv[1], qkv[2]
    s = jnp.einsum('bhld,bhmd->bhlm', q, k) * scale
    p = jax.nn.softmax(s, axis=-1)
    o = jnp.einsum('bhlm,bhmd->bhld', p, v)
    return o.transpose(0, 2, 1, 3).reshape(B, L, D)


if __name__ == "__main__":
    # Small shapes consistent with the module: B=2, L=8, D=32, num_heads=4.
    B, L, D, H = 2, 8, 32, 4

    key = jax.random.PRNGKey(0)
    kx, kw, kb = jax.random.split(key, 3)

    x = jax.random.normal(kx, (B, L, D), dtype=jnp.float32)
    # Deterministic nn.Linear-style init: uniform(-1/sqrt(D), 1/sqrt(D)).
    bound = 1.0 / (D ** 0.5)
    w_qkv = jax.random.uniform(kw, (3 * D, D), minval=-bound, maxval=bound,
                               dtype=jnp.float32)
    b_qkv = jax.random.uniform(kb, (3 * D,), minval=-bound, maxval=bound,
                               dtype=jnp.float32)

    ref = self_attention_ref(x, w_qkv, b_qkv, H)

    # 1) Full-precision path (MXU operands stay f32).  Tolerance absorbs the
    #    EUP approximate reciprocal in the softmax denominator.
    out = jax.block_until_ready(self_attention_pallas(x, w_qkv, b_qkv, H))
    assert out.shape == (B, L, D)
    assert jnp.allclose(out, ref, atol=2e-3, rtol=2e-3), "f32 path mismatch"

    # 2) Fast-MXU path: bf16 operands, f32 accumulation / f32 softmax.  Loose
    #    tolerance only reflects bf16 operand rounding vs the f32 reference.
    out_bf = jax.block_until_ready(
        self_attention_pallas(x, w_qkv, b_qkv, H, mxu_dtype=jnp.bfloat16))
    assert out_bf.shape == (B, L, D)
    assert jnp.allclose(out_bf.astype(jnp.float32), ref, atol=1e-1, rtol=1e-1), \
        "bf16 MXU path mismatch"

    print("KERNEL_OK")
</pallas_src>

<mosaic_0001>
module attributes {stable_mosaic.version = 11 : i64} {
  func.func @_attn_kernel(%arg0: i32, %arg1: memref<2x8x32xf32, #tpu.memory_space<vmem>>, %arg2: memref<32x96xf32, #tpu.memory_space<vmem>>, %arg3: memref<1x96xf32, #tpu.memory_space<vmem>>, %arg4: memref<2x8x32xf32, #tpu.memory_space<vmem>>, %arg5: memref<2x8x32xf32, #tpu.memory_space<vmem>>) attributes {dimension_semantics = [#tpu.dimension_semantics<parallel>], iteration_bounds = array<i64: 1>, scalar_prefetch = 0 : i64, scratch_operands = 1 : i64, tpu.core_type = #tpu.core_type<tc>, window_params = [{transform_indices = @transform_0, window_bounds = array<i64: 2, 8, 32>}, {pipeline_mode = #tpu.pipeline_mode<synchronous>, transform_indices = @transform_1, window_bounds = array<i64: 32, 96>}, {pipeline_mode = #tpu.pipeline_mode<synchronous>, transform_indices = @transform_2, window_bounds = array<i64: 1, 96>}, {transform_indices = @transform_3, window_bounds = array<i64: 2, 8, 32>}]} {
    %c0 = arith.constant 0 : index
    %c0_0 = arith.constant 0 : index
    %c0_1 = arith.constant 0 : index
    %0 = vector.load %arg1[%c0, %c0_0, %c0_1] : memref<2x8x32xf32, #tpu.memory_space<vmem>>, vector<2x8x32xf32>
    %1 = vector.shape_cast %0 : vector<2x8x32xf32> to vector<16x32xf32>
    %c0_2 = arith.constant 0 : index
    %c0_3 = arith.constant 0 : index
    %2 = vector.load %arg2[%c0_2, %c0_3] : memref<32x96xf32, #tpu.memory_space<vmem>>, vector<32x96xf32>
    %cst = arith.constant dense<0.000000e+00> : vector<16x96xf32>
    %3 = tpu.matmul %1, %2, %cst {dimension_numbers = #tpu.dot_dimension_numbers<[1], [0], [0], [1], [0, 0, 1, 1], [], []>} : vector<16x32xf32>, vector<32x96xf32>, vector<16x96xf32> -> vector<16x96xf32>
    %c0_4 = arith.constant 0 : index
    %c0_5 = arith.constant 0 : index
    %4 = vector.load %arg3[%c0_4, %c0_5] : memref<1x96xf32, #tpu.memory_space<vmem>>, vector<1x96xf32>
    %5 = vector.shape_cast %4 : vector<1x96xf32> to vector<96xf32>
    %6 = vector.shape_cast %5 : vector<96xf32> to vector<1x96xf32>
    %7 = vector.broadcast %6 : vector<1x96xf32> to vector<16x96xf32>
    %8 = arith.addf %3, %7 : vector<16x96xf32>
    %9 = vector.extract_strided_slice %8 {offsets = [0, 0], sizes = [8, 96], strides = [1, 1]} : vector<16x96xf32> to vector<8x96xf32>
    %10 = vector.extract_strided_slice %9 {offsets = [0, 0], sizes = [8, 8], strides = [1, 1]} : vector<8x96xf32> to vector<8x8xf32>
    %11 = vector.extract_strided_slice %9 {offsets = [0, 32], sizes = [8, 8], strides = [1, 1]} : vector<8x96xf32> to vector<8x8xf32>
    %12 = vector.extract_strided_slice %9 {offsets = [0, 64], sizes = [8, 8], strides = [1, 1]} : vector<8x96xf32> to vector<8x8xf32>
    %13 = tpu.transpose %11, [1, 0] : vector<8x8xf32> -> vector<8x8xf32>
    %cst_6 = arith.constant dense<0.000000e+00> : vector<8x8xf32>
    %14 = tpu.matmul %10, %13, %cst_6 {dimension_numbers = #tpu.dot_dimension_numbers<[1], [0], [0], [1], [0, 0, 1, 1], [], []>} : vector<8x8xf32>, vector<8x8xf32>, vector<8x8xf32> -> vector<8x8xf32>
    %cst_7 = arith.constant dense<0xFF800000> : vector<8xf32>
    %15 = vector.multi_reduction <maximumf>, %14, %cst_7 [1] : vector<8x8xf32> to vector<8xf32>
    %16 = vector.shape_cast %15 : vector<8xf32> to vector<8x1xf32>
    %17 = vector.broadcast %16 : vector<8x1xf32> to vector<8x8xf32>
    %18 = arith.subf %14, %17 : vector<8x8xf32>
    %19 = math.exp %18 : vector<8x8xf32>
    %cst_8 = arith.constant dense<0.000000e+00> : vector<8xf32>
    %20 = vector.multi_reduction <add>, %19, %cst_8 [1] : vector<8x8xf32> to vector<8xf32>
    %21 = vector.shape_cast %20 : vector<8xf32> to vector<8x1xf32>
    %cst_9 = arith.constant dense<0.000000e+00> : vector<8x8xf32>
    %22 = tpu.matmul %19, %12, %cst_9 {dimension_numbers = #tpu.dot_dimension_numbers<[1], [0], [0], [1], [0, 0, 1, 1], [], []>} : vector<8x8xf32>, vector<8x8xf32>, vector<8x8xf32> -> vector<8x8xf32>
    %23 = tpu.reciprocal %21 {approx = true} : vector<8x1xf32> -> vector<8x1xf32>
    %24 = vector.broadcast %23 : vector<8x1xf32> to vector<8x8xf32>
    %25 = arith.mulf %22, %24 : vector<8x8xf32>
    %c0_10 = arith.constant 0 : index
    %c0_11 = arith.constant 0 : index
    %c0_12 = arith.constant 0 : index
    %26 = vector.load %arg5[%c0_10, %c0_11, %c0_12] : memref<2x8x32xf32, #tpu.memory_space<vmem>>, vector<1x8x8xf32>
    %27 = vector.shape_cast %26 : vector<1x8x8xf32> to vector<8x8xf32>
    %28 = vector.shape_cast %25 : vector<8x8xf32> to vector<1x8x8xf32>
    tpu.vector_store %arg5[%c0_10, %c0_11, %c0_12], %28 {strides = array<i32>} : memref<2x8x32xf32, #tpu.memory_space<vmem>>, vector<1x8x8xf32>,
    %29 = vector.extract_strided_slice %9 {offsets = [0, 8], sizes = [8, 8], strides = [1, 1]} : vector<8x96xf32> to vector<8x8xf32>
    %30 = vector.extract_strided_slice %9 {offsets = [0, 40], sizes = [8, 8], strides = [1, 1]} : vector<8x96xf32> to vector<8x8xf32>
    %31 = vector.extract_strided_slice %9 {offsets = [0, 72], sizes = [8, 8], strides = [1, 1]} : vector<8x96xf32> to vector<8x8xf32>
    %32 = tpu.transpose %30, [1, 0] : vector<8x8xf32> -> vector<8x8xf32>
    %cst_13 = arith.constant dense<0.000000e+00> : vector<8x8xf32>
    %33 = tpu.matmul %29, %32, %cst_13 {dimension_numbers = #tpu.dot_dimension_numbers<[1], [0], [0], [1], [0, 0, 1, 1], [], []>} : vector<8x8xf32>, vector<8x8xf32>, vector<8x8xf32> -> vector<8x8xf32>
    %cst_14 = arith.constant dense<0xFF800000> : vector<8xf32>
    %34 = vector.multi_reduction <maximumf>, %33, %cst_14 [1] : vector<8x8xf32> to vector<8xf32>
    %35 = vector.shape_cast %34 : vector<8xf32> to vector<8x1xf32>
    %36 = vector.broadcast %35 : vector<8x1xf32> to vector<8x8xf32>
    %37 = arith.subf %33, %36 : vector<8x8xf32>
    %38 = math.exp %37 : vector<8x8xf32>
    %cst_15 = arith.constant dense<0.000000e+00> : vector<8xf32>
    %39 = vector.multi_reduction <add>, %38, %cst_15 [1] : vector<8x8xf32> to vector<8xf32>
    %40 = vector.shape_cast %39 : vector<8xf32> to vector<8x1xf32>
    %cst_16 = arith.constant dense<0.000000e+00> : vector<8x8xf32>
    %41 = tpu.matmul %38, %31, %cst_16 {dimension_numbers = #tpu.dot_dimension_numbers<[1], [0], [0], [1], [0, 0, 1, 1], [], []>} : vector<8x8xf32>, vector<8x8xf32>, vector<8x8xf32> -> vector<8x8xf32>
    %42 = tpu.reciprocal %40 {approx = true} : vector<8x1xf32> -> vector<8x1xf32>
    %43 = vector.broadcast %42 : vector<8x1xf32> to vector<8x8xf32>
    %44 = arith.mulf %41, %43 : vector<8x8xf32>
    %c0_17 = arith.constant 0 : index
    %c0_18 = arith.constant 0 : index
    %c8 = arith.constant 8 : index
    %45 = vector.load %arg5[%c0_17, %c0_18, %c8] : memref<2x8x32xf32, #tpu.memory_space<vmem>>, vector<1x8x8xf32>
    %46 = vector.shape_cast %45 : vector<1x8x8xf32> to vector<8x8xf32>
    %47 = vector.shape_cast %44 : vector<8x8xf32> to vector<1x8x8xf32>
    tpu.vector_store %arg5[%c0_17, %c0_18, %c8], %47 {strides = array<i32>} : memref<2x8x32xf32, #tpu.memory_space<vmem>>, vector<1x8x8xf32>,
    %48 = vector.extract_strided_slice %9 {offsets = [0, 16], sizes = [8, 8], strides = [1, 1]} : vector<8x96xf32> to vector<8x8xf32>
    %49 = vector.extract_strided_slice %9 {offsets = [0, 48], sizes = [8, 8], strides = [1, 1]} : vector<8x96xf32> to vector<8x8xf32>
    %50 = vector.extract_strided_slice %9 {offsets = [0, 80], sizes = [8, 8], strides = [1, 1]} : vector<8x96xf32> to vector<8x8xf32>
    %51 = tpu.transpose %49, [1, 0] : vector<8x8xf32> -> vector<8x8xf32>
    %cst_19 = arith.constant dense<0.000000e+00> : vector<8x8xf32>
    %52 = tpu.matmul %48, %51, %cst_19 {dimension_numbers = #tpu.dot_dimension_numbers<[1], [0], [0], [1], [0, 0, 1, 1], [], []>} : vector<8x8xf32>, vector<8x8xf32>, vector<8x8xf32> -> vector<8x8xf32>
    %cst_20 = arith.constant dense<0xFF800000> : vector<8xf32>
    %53 = vector.multi_reduction <maximumf>, %52, %cst_20 [1] : vector<8x8xf32> to vector<8xf32>
    %54 = vector.shape_cast %53 : vector<8xf32> to vector<8x1xf32>
    %55 = vector.broadcast %54 : vector<8x1xf32> to vector<8x8xf32>
    %56 = arith.subf %52, %55 : vector<8x8xf32>
    %57 = math.exp %56 : vector<8x8xf32>
    %cst_21 = arith.constant dense<0.000000e+00> : vector<8xf32>
    %58 = vector.multi_reduction <add>, %57, %cst_21 [1] : vector<8x8xf32> to vector<8xf32>
    %59 = vector.shape_cast %58 : vector<8xf32> to vector<8x1xf32>
    %cst_22 = arith.constant dense<0.000000e+00> : vector<8x8xf32>
    %60 = tpu.matmul %57, %50, %cst_22 {dimension_numbers = #tpu.dot_dimension_numbers<[1], [0], [0], [1], [0, 0, 1, 1], [], []>} : vector<8x8xf32>, vector<8x8xf32>, vector<8x8xf32> -> vector<8x8xf32>
    %61 = tpu.reciprocal %59 {approx = true} : vector<8x1xf32> -> vector<8x1xf32>
    %62 = vector.broadcast %61 : vector<8x1xf32> to vector<8x8xf32>
    %63 = arith.mulf %60, %62 : vector<8x8xf32>
    %c0_23 = arith.constant 0 : index
    %c0_24 = arith.constant 0 : index
    %c16 = arith.constant 16 : index
    %64 = vector.load %arg5[%c0_23, %c0_24, %c16] : memref<2x8x32xf32, #tpu.memory_space<vmem>>, vector<1x8x8xf32>
    %65 = vector.shape_cast %64 : vector<1x8x8xf32> to vector<8x8xf32>
    %66 = vector.shape_cast %63 : vector<8x8xf32> to vector<1x8x8xf32>
    tpu.vector_store %arg5[%c0_23, %c0_24, %c16], %66 {strides = array<i32>} : memref<2x8x32xf32, #tpu.memory_space<vmem>>, vector<1x8x8xf32>,
    %67 = vector.extract_strided_slice %9 {offsets = [0, 24], sizes = [8, 8], strides = [1, 1]} : vector<8x96xf32> to vector<8x8xf32>
    %68 = vector.extract_strided_slice %9 {offsets = [0, 56], sizes = [8, 8], strides = [1, 1]} : vector<8x96xf32> to vector<8x8xf32>
    %69 = vector.extract_strided_slice %9 {offsets = [0, 88], sizes = [8, 8], strides = [1, 1]} : vector<8x96xf32> to vector<8x8xf32>
    %70 = tpu.transpose %68, [1, 0] : vector<8x8xf32> -> vector<8x8xf32>
    %cst_25 = arith.constant dense<0.000000e+00> : vector<8x8xf32>
    %71 = tpu.matmul %67, %70, %cst_25 {dimension_numbers = #tpu.dot_dimension_numbers<[1], [0], [0], [1], [0, 0, 1, 1], [], []>} : vector<8x8xf32>, vector<8x8xf32>, vector<8x8xf32> -> vector<8x8xf32>
    %cst_26 = arith.constant dense<0xFF800000> : vector<8xf32>
    %72 = vector.multi_reduction <maximumf>, %71, %cst_26 [1] : vector<8x8xf32> to vector<8xf32>
    %73 = vector.shape_cast %72 : vector<8xf32> to vector<8x1xf32>
    %74 = vector.broadcast %73 : vector<8x1xf32> to vector<8x8xf32>
    %75 = arith.subf %71, %74 : vector<8x8xf32>
    %76 = math.exp %75 : vector<8x8xf32>
    %cst_27 = arith.constant dense<0.000000e+00> : vector<8xf32>
    %77 = vector.multi_reduction <add>, %76, %cst_27 [1] : vector<8x8xf32> to vector<8xf32>
    %78 = vector.shape_cast %77 : vector<8xf32> to vector<8x1xf32>
    %cst_28 = arith.constant dense<0.000000e+00> : vector<8x8xf32>
    %79 = tpu.matmul %76, %69, %cst_28 {dimension_numbers = #tpu.dot_dimension_numbers<[1], [0], [0], [1], [0, 0, 1, 1], [], []>} : vector<8x8xf32>, vector<8x8xf32>, vector<8x8xf32> -> vector<8x8xf32>
    %80 = tpu.reciprocal %78 {approx = true} : vector<8x1xf32> -> vector<8x1xf32>
    %81 = vector.broadcast %80 : vector<8x1xf32> to vector<8x8xf32>
    %82 = arith.mulf %79, %81 : vector<8x8xf32>
    %c0_29 = arith.constant 0 : index
    %c0_30 = arith.constant 0 : index
    %c24 = arith.constant 24 : index
    %83 = vector.load %arg5[%c0_29, %c0_30, %c24] : memref<2x8x32xf32, #tpu.memory_space<vmem>>, vector<1x8x8xf32>
    %84 = vector.shape_cast %83 : vector<1x8x8xf32> to vector<8x8xf32>
    %85 = vector.shape_cast %82 : vector<8x8xf32> to vector<1x8x8xf32>
    tpu.vector_store %arg5[%c0_29, %c0_30, %c24], %85 {strides = array<i32>} : memref<2x8x32xf32, #tpu.memory_space<vmem>>, vector<1x8x8xf32>,
    %86 = vector.extract_strided_slice %8 {offsets = [8, 0], sizes = [8, 96], strides = [1, 1]} : vector<16x96xf32> to vector<8x96xf32>
    %87 = vector.extract_strided_slice %86 {offsets = [0, 0], sizes = [8, 8], strides = [1, 1]} : vector<8x96xf32> to vector<8x8xf32>
    %88 = vector.extract_strided_slice %86 {offsets = [0, 32], sizes = [8, 8], strides = [1, 1]} : vector<8x96xf32> to vector<8x8xf32>
    %89 = vector.extract_strided_slice %86 {offsets = [0, 64], sizes = [8, 8], strides = [1, 1]} : vector<8x96xf32> to vector<8x8xf32>
    %90 = tpu.transpose %88, [1, 0] : vector<8x8xf32> -> vector<8x8xf32>
    %cst_31 = arith.constant dense<0.000000e+00> : vector<8x8xf32>
    %91 = tpu.matmul %87, %90, %cst_31 {dimension_numbers = #tpu.dot_dimension_numbers<[1], [0], [0], [1], [0, 0, 1, 1], [], []>} : vector<8x8xf32>, vector<8x8xf32>, vector<8x8xf32> -> vector<8x8xf32>
    %cst_32 = arith.constant dense<0xFF800000> : vector<8xf32>
    %92 = vector.multi_reduction <maximumf>, %91, %cst_32 [1] : vector<8x8xf32> to vector<8xf32>
    %93 = vector.shape_cast %92 : vector<8xf32> to vector<8x1xf32>
    %94 = vector.broadcast %93 : vector<8x1xf32> to vector<8x8xf32>
    %95 = arith.subf %91, %94 : vector<8x8xf32>
    %96 = math.exp %95 : vector<8x8xf32>
    %cst_33 = arith.constant dense<0.000000e+00> : vector<8xf32>
    %97 = vector.multi_reduction <add>, %96, %cst_33 [1] : vector<8x8xf32> to vector<8xf32>
    %98 = vector.shape_cast %97 : vector<8xf32> to vector<8x1xf32>
    %cst_34 = arith.constant dense<0.000000e+00> : vector<8x8xf32>
    %99 = tpu.matmul %96, %89, %cst_34 {dimension_numbers = #tpu.dot_dimension_numbers<[1], [0], [0], [1], [0, 0, 1, 1], [], []>} : vector<8x8xf32>, vector<8x8xf32>, vector<8x8xf32> -> vector<8x8xf32>
    %100 = tpu.reciprocal %98 {approx = true} : vector<8x1xf32> -> vector<8x1xf32>
    %101 = vector.broadcast %100 : vector<8x1xf32> to vector<8x8xf32>
    %102 = arith.mulf %99, %101 : vector<8x8xf32>
    %c1 = arith.constant 1 : index
    %c0_35 = arith.constant 0 : index
    %c0_36 = arith.constant 0 : index
    %103 = vector.load %arg5[%c1, %c0_35, %c0_36] : memref<2x8x32xf32, #tpu.memory_space<vmem>>, vector<1x8x8xf32>
    %104 = vector.shape_cast %103 : vector<1x8x8xf32> to vector<8x8xf32>
    %105 = vector.shape_cast %102 : vector<8x8xf32> to vector<1x8x8xf32>
    tpu.vector_store %arg5[%c1, %c0_35, %c0_36], %105 {strides = array<i32>} : memref<2x8x32xf32, #tpu.memory_space<vmem>>, vector<1x8x8xf32>,
    %106 = vector.extract_strided_slice %86 {offsets = [0, 8], sizes = [8, 8], strides = [1, 1]} : vector<8x96xf32> to vector<8x8xf32>
    %107 = vector.extract_strided_slice %86 {offsets = [0, 40], sizes = [8, 8], strides = [1, 1]} : vector<8x96xf32> to vector<8x8xf32>
    %108 = vector.extract_strided_slice %86 {offsets = [0, 72], sizes = [8, 8], strides = [1, 1]} : vector<8x96xf32> to vector<8x8xf32>
    %109 = tpu.transpose %107, [1, 0] : vector<8x8xf32> -> vector<8x8xf32>
    %cst_37 = arith.constant dense<0.000000e+00> : vector<8x8xf32>
    %110 = tpu.matmul %106, %109, %cst_37 {dimension_numbers = #tpu.dot_dimension_numbers<[1], [0], [0], [1], [0, 0, 1, 1], [], []>} : vector<8x8xf32>, vector<8x8xf32>, vector<8x8xf32> -> vector<8x8xf32>
    %cst_38 = arith.constant dense<0xFF800000> : vector<8xf32>
    %111 = vector.multi_reduction <maximumf>, %110, %cst_38 [1] : vector<8x8xf32> to vector<8xf32>
    %112 = vector.shape_cast %111 : vector<8xf32> to vector<8x1xf32>
    %113 = vector.broadcast %112 : vector<8x1xf32> to vector<8x8xf32>
    %114 = arith.subf %110, %113 : vector<8x8xf32>
    %115 = math.exp %114 : vector<8x8xf32>
    %cst_39 = arith.constant dense<0.000000e+00> : vector<8xf32>
    %116 = vector.multi_reduction <add>, %115, %cst_39 [1] : vector<8x8xf32> to vector<8xf32>
    %117 = vector.shape_cast %116 : vector<8xf32> to vector<8x1xf32>
    %cst_40 = arith.constant dense<0.000000e+00> : vector<8x8xf32>
    %118 = tpu.matmul %115, %108, %cst_40 {dimension_numbers = #tpu.dot_dimension_numbers<[1], [0], [0], [1], [0, 0, 1, 1], [], []>} : vector<8x8xf32>, vector<8x8xf32>, vector<8x8xf32> -> vector<8x8xf32>
    %119 = tpu.reciprocal %117 {approx = true} : vector<8x1xf32> -> vector<8x1xf32>
    %120 = vector.broadcast %119 : vector<8x1xf32> to vector<8x8xf32>
    %121 = arith.mulf %118, %120 : vector<8x8xf32>
    %c1_41 = arith.constant 1 : index
    %c0_42 = arith.constant 0 : index
    %c8_43 = arith.constant 8 : index
    %122 = vector.load %arg5[%c1_41, %c0_42, %c8_43] : memref<2x8x32xf32, #tpu.memory_space<vmem>>, vector<1x8x8xf32>
    %123 = vector.shape_cast %122 : vector<1x8x8xf32> to vector<8x8xf32>
    %124 = vector.shape_cast %121 : vector<8x8xf32> to vector<1x8x8xf32>
    tpu.vector_store %arg5[%c1_41, %c0_42, %c8_43], %124 {strides = array<i32>} : memref<2x8x32xf32, #tpu.memory_space<vmem>>, vector<1x8x8xf32>,
    %125 = vector.extract_strided_slice %86 {offsets = [0, 16], sizes = [8, 8], strides = [1, 1]} : vector<8x96xf32> to vector<8x8xf32>
    %126 = vector.extract_strided_slice %86 {offsets = [0, 48], sizes = [8, 8], strides = [1, 1]} : vector<8x96xf32> to vector<8x8xf32>
    %127 = vector.extract_strided_slice %86 {offsets = [0, 80], sizes = [8, 8], strides = [1, 1]} : vector<8x96xf32> to vector<8x8xf32>
    %128 = tpu.transpose %126, [1, 0] : vector<8x8xf32> -> vector<8x8xf32>
    %cst_44 = arith.constant dense<0.000000e+00> : vector<8x8xf32>
    %129 = tpu.matmul %125, %128, %cst_44 {dimension_numbers = #tpu.dot_dimension_numbers<[1], [0], [0], [1], [0, 0, 1, 1], [], []>} : vector<8x8xf32>, vector<8x8xf32>, vector<8x8xf32> -> vector<8x8xf32>
    %cst_45 = arith.constant dense<0xFF800000> : vector<8xf32>
    %130 = vector.multi_reduction <maximumf>, %129, %cst_45 [1] : vector<8x8xf32> to vector<8xf32>
    %131 = vector.shape_cast %130 : vector<8xf32> to vector<8x1xf32>
    %132 = vector.broadcast %131 : vector<8x1xf32> to vector<8x8xf32>
    %133 = arith.subf %129, %132 : vector<8x8xf32>
    %134 = math.exp %133 : vector<8x8xf32>
    %cst_46 = arith.constant dense<0.000000e+00> : vector<8xf32>
    %135 = vector.multi_reduction <add>, %134, %cst_46 [1] : vector<8x8xf32> to vector<8xf32>
    %136 = vector.shape_cast %135 : vector<8xf32> to vector<8x1xf32>
    %cst_47 = arith.constant dense<0.000000e+00> : vector<8x8xf32>
    %137 = tpu.matmul %134, %127, %cst_47 {dimension_numbers = #tpu.dot_dimension_numbers<[1], [0], [0], [1], [0, 0, 1, 1], [], []>} : vector<8x8xf32>, vector<8x8xf32>, vector<8x8xf32> -> vector<8x8xf32>
    %138 = tpu.reciprocal %136 {approx = true} : vector<8x1xf32> -> vector<8x1xf32>
    %139 = vector.broadcast %138 : vector<8x1xf32> to vector<8x8xf32>
    %140 = arith.mulf %137, %139 : vector<8x8xf32>
    %c1_48 = arith.constant 1 : index
    %c0_49 = arith.constant 0 : index
    %c16_50 = arith.constant 16 : index
    %141 = vector.load %arg5[%c1_48, %c0_49, %c16_50] : memref<2x8x32xf32, #tpu.memory_space<vmem>>, vector<1x8x8xf32>
    %142 = vector.shape_cast %141 : vector<1x8x8xf32> to vector<8x8xf32>
    %143 = vector.shape_cast %140 : vector<8x8xf32> to vector<1x8x8xf32>
    tpu.vector_store %arg5[%c1_48, %c0_49, %c16_50], %143 {strides = array<i32>} : memref<2x8x32xf32, #tpu.memory_space<vmem>>, vector<1x8x8xf32>,
    %144 = vector.extract_strided_slice %86 {offsets = [0, 24], sizes = [8, 8], strides = [1, 1]} : vector<8x96xf32> to vector<8x8xf32>
    %145 = vector.extract_strided_slice %86 {offsets = [0, 56], sizes = [8, 8], strides = [1, 1]} : vector<8x96xf32> to vector<8x8xf32>
    %146 = vector.extract_strided_slice %86 {offsets = [0, 88], sizes = [8, 8], strides = [1, 1]} : vector<8x96xf32> to vector<8x8xf32>
    %147 = tpu.transpose %145, [1, 0] : vector<8x8xf32> -> vector<8x8xf32>
    %cst_51 = arith.constant dense<0.000000e+00> : vector<8x8xf32>
    %148 = tpu.matmul %144, %147, %cst_51 {dimension_numbers = #tpu.dot_dimension_numbers<[1], [0], [0], [1], [0, 0, 1, 1], [], []>} : vector<8x8xf32>, vector<8x8xf32>, vector<8x8xf32> -> vector<8x8xf32>
    %cst_52 = arith.constant dense<0xFF800000> : vector<8xf32>
    %149 = vector.multi_reduction <maximumf>, %148, %cst_52 [1] : vector<8x8xf32> to vector<8xf32>
    %150 = vector.shape_cast %149 : vector<8xf32> to vector<8x1xf32>
    %151 = vector.broadcast %150 : vector<8x1xf32> to vector<8x8xf32>
    %152 = arith.subf %148, %151 : vector<8x8xf32>
    %153 = math.exp %152 : vector<8x8xf32>
    %cst_53 = arith.constant dense<0.000000e+00> : vector<8xf32>
    %154 = vector.multi_reduction <add>, %153, %cst_53 [1] : vector<8x8xf32> to vector<8xf32>
    %155 = vector.shape_cast %154 : vector<8xf32> to vector<8x1xf32>
    %cst_54 = arith.constant dense<0.000000e+00> : vector<8x8xf32>
    %156 = tpu.matmul %153, %146, %cst_54 {dimension_numbers = #tpu.dot_dimension_numbers<[1], [0], [0], [1], [0, 0, 1, 1], [], []>} : vector<8x8xf32>, vector<8x8xf32>, vector<8x8xf32> -> vector<8x8xf32>
    %157 = tpu.reciprocal %155 {approx = true} : vector<8x1xf32> -> vector<8x1xf32>
    %158 = vector.broadcast %157 : vector<8x1xf32> to vector<8x8xf32>
    %159 = arith.mulf %156, %158 : vector<8x8xf32>
    %c1_55 = arith.constant 1 : index
    %c0_56 = arith.constant 0 : index
    %c24_57 = arith.constant 24 : index
    %160 = vector.load %arg5[%c1_55, %c0_56, %c24_57] : memref<2x8x32xf32, #tpu.memory_space<vmem>>, vector<1x8x8xf32>
    %161 = vector.shape_cast %160 : vector<1x8x8xf32> to vector<8x8xf32>
    %162 = vector.shape_cast %159 : vector<8x8xf32> to vector<1x8x8xf32>
    tpu.vector_store %arg5[%c1_55, %c0_56, %c24_57], %162 {strides = array<i32>} : memref<2x8x32xf32, #tpu.memory_space<vmem>>, vector<1x8x8xf32>,
    %c0_58 = arith.constant 0 : index
    %c0_59 = arith.constant 0 : index
    %c0_60 = arith.constant 0 : index
    %163 = vector.load %arg5[%c0_58, %c0_59, %c0_60] : memref<2x8x32xf32, #tpu.memory_space<vmem>>, vector<2x8x32xf32>
    %c0_61 = arith.constant 0 : index
    %c0_62 = arith.constant 0 : index
    %c0_63 = arith.constant 0 : index
    %164 = vector.load %arg4[%c0_61, %c0_62, %c0_63] : memref<2x8x32xf32, #tpu.memory_space<vmem>>, vector<2x8x32xf32>
    tpu.vector_store %arg4[%c0_61, %c0_62, %c0_63], %163 {strides = array<i32>} : memref<2x8x32xf32, #tpu.memory_space<vmem>>, vector<2x8x32xf32>,
    return
  }
  func.func @transform_0(%arg0: i32) -> (i32, i32, i32) {
    %c0_i32 = arith.constant 0 : i32
    %c0_i32_0 = arith.constant 0 : i32
    %c0_i32_1 = arith.constant 0 : i32
    return %arg0, %c0_i32, %c0_i32_0 : i32, i32, i32
  }
  func.func @transform_1(%arg0: i32) -> (i32, i32) {
    %c0_i32 = arith.constant 0 : i32
    %c0_i32_0 = arith.constant 0 : i32
    %c0_i32_1 = arith.constant 0 : i32
    return %c0_i32, %c0_i32_0 : i32, i32
  }
  func.func @transform_2(%arg0: i32) -> (i32, i32) {
    %c0_i32 = arith.constant 0 : i32
    %c0_i32_0 = arith.constant 0 : i32
    %c0_i32_1 = arith.constant 0 : i32
    return %c0_i32, %c0_i32_0 : i32, i32
  }
  func.func @transform_3(%arg0: i32) -> (i32, i32, i32) {
    %c0_i32 = arith.constant 0 : i32
    %c0_i32_0 = arith.constant 0 : i32
    %c0_i32_1 = arith.constant 0 : i32
    return %arg0, %c0_i32, %c0_i32_0 : i32, i32, i32
  }
}

</mosaic_0001>

<llo_original>
// kernel: tpu_custom_call.1
$region0: #{tpu_custom_call.1}
  #allocation0 [shape = 'u32[]', space=smem, size = 0x4, offset = 0x4, fixed_abs, tag = 'smem constant byte address 0x4 - core index']
  #allocation1 [shape = 'u32[144,128]{1,0:T(1,128)}', space=vmem, size = 0x12000, scoped, tag = 'internal scratch']
  #allocation2 [shape = 'f32[2,8,32]{2,1,0:T(8,128)}', space=vmem, size = 0x2000, scoped, tag = 'scratch operand']
  %s0 = inlined_call_operand.hbm [shape: f32[2,8,32], index: 0, kind: input, shape index: {}]
  %s1 = inlined_call_operand.hbm [shape: f32[32,96], index: 1, kind: input, shape index: {}]
  %s2 = inlined_call_operand.vmem [shape: f32[1,96], index: 2, kind: input, shape index: {}]
  %s3 = inlined_call_operand.hbm [shape: f32[2,8,32], index: 3, kind: output, shape index: {}]
  %s4 = sld [smem:[#allocation0]]
  $region30: #{tpu_custom_call.1} parent=0
    _
  %s6 = ssub.s32 1, %s4
  %s7 = scalar_select 0, %s6, %s4
  $region1: #{tpu_custom_call.1} parent=0
    #allocation3 [shape = 'u8[8192]{0}', space=vmem, size = 0x2000, scoped, tag = 'input window, operand 0, single buffered']
    #allocation4 [shape = 's32[1]{0}', space=sflag, size = 0x4, scoped, tag = 'scoped memory for tpu_custom_call.1']
    #allocation5 [shape = 's32[1]{0}', space=sflag, size = 0x4, scoped, tag = 'scoped memory for tpu_custom_call.1']
    #allocation6 [shape = 'u8[16384]{0}', space=vmem, size = 0x4000, scoped, tag = 'input window, operand 1, single buffered']
    #allocation7 [shape = 's32[1]{0}', space=sflag, size = 0x4, scoped, tag = 'scoped memory for tpu_custom_call.1']
    #allocation8 [shape = 'u8[8192]{0}', space=vmem, size = 0x2000, scoped, tag = 'output window, operand 0, single buffered']
    %8 = vsyncpa [#allocation4], 0
    %9 = vsyncpa [#allocation7], 0
    %10 = vsyncpa [#allocation5], 0
    // Predicated region
    $region2: #{tpu_custom_call.1} parent=1 // pred_check
      _
    $region3: #{tpu_custom_call.1} parent=1 // pred_check_branch
      %12 = sbr.rel (0) target = $region5
    $region4: #{tpu_custom_call.1} parent=1 // pred_region
      %s14 = ssub.s32 256, 256
      %15 = vsyncadd [#allocation4], %s14
      %s16 = sshll.u32 [#allocation3], 4
      %s17 = int_to_ptr.vmem [resolvable:$true] %s16
      %22 = dma.hbm_to_vmem [thread:$0]  %s0, 256, %s17, [#allocation4], 128, 128, 8
    $region5: #{tpu_custom_call.1} parent=1 // pred_fallthru
      _
    // Predicated region
    $region6: #{tpu_custom_call.1} parent=1 // pred_check
      _
    $region7: #{tpu_custom_call.1} parent=1 // pred_check_branch
      %24 = sbr.rel (0) target = $region9
    $region8: #{tpu_custom_call.1} parent=1 // pred_region
      %s26 = ssub.s32 512, 512
      %27 = vsyncadd [#allocation7], %s26
      %s28 = sshll.u32 [#allocation6], 4
      %s29 = int_to_ptr.vmem [resolvable:$true] %s28
      %34 = dma.hbm_to_vmem [thread:$0]  %s1, 512, %s29, [#allocation7], 128, 128, 8
    $region9: #{tpu_custom_call.1} parent=1 // pred_fallthru
      _
    // Predicated region
    $region10: #{tpu_custom_call.1} parent=1 // pred_check
      _
    $region11: #{tpu_custom_call.1} parent=1 // pred_check_branch
      %36 = sbr.rel (0) target = $region13
    $region12: #{tpu_custom_call.1} parent=1 // pred_region
      _
    $region13: #{tpu_custom_call.1} parent=1 // pred_fallthru
      _
    // Predicated region
    $region14: #{tpu_custom_call.1} parent=1 // pred_check
      _
    $region15: #{tpu_custom_call.1} parent=1 // pred_check_branch
      %38 = sbr.rel (0) target = $region17
    $region16: #{tpu_custom_call.1} parent=1 // pred_region
      %39 = dma.done [#allocation4], 256
    $region17: #{tpu_custom_call.1} parent=1 // pred_fallthru
      _
    // Predicated region
    $region18: #{tpu_custom_call.1} parent=1 // pred_check
      _
    $region19: #{tpu_custom_call.1} parent=1 // pred_check_branch
      %41 = sbr.rel (0) target = $region21
    $region20: #{tpu_custom_call.1} parent=1 // pred_region
      %42 = dma.done [#allocation7], 512
    $region21: #{tpu_custom_call.1} parent=1 // pred_fallthru
      _
    %v43 = vld [vmem:[#allocation3] sm:$0xff]
    %v44 = vld [vmem:[#allocation3 + $0x8] sm:$0xff]
    %v45 = vld [vmem:[#allocation6] sm:$0xff]
    %v46 = vld [vmem:[#allocation6 + $0x8] sm:$0xff]
    %v47 = vld [vmem:[#allocation6 + $0x10] sm:$0xff]
    %v48 = vld [vmem:[#allocation6 + $0x18] sm:$0xff]
    %v49 = vld [vmem:[%s2] sm:$0x1]
    %v51 = vlaneseq
    %v52 = vshrl.u32 %v51, 7
    %v53 = vsub.s32 0, %v52
    %v54 = vrot.slane %v49, %v53
    %vm56 = vcmask 261120
    %v58 = vsel %vm56, %v43, 0
    %v61 = vsel %vm56, %v44, 0
    %63 = vmatprep.subr.mxu0 0.0
    %64 = vmatpush1.msra.mxu0 %v45
    %65 = vmatprep.subr.mxu0 0.0
    %66 = vmatpush1.msra.mxu0 %v46
    %67 = vmatprep.subr.mxu0 0.0
    %68 = vmatpush1.msra.mxu0 %v47
    %69 = vmatprep.subr.mxu0 0.0
    %70 = vmatpush1.msra.mxu0 %v48
    %71 = vmatprep.subr.mxu0 0.0
    %72 = vmatpush1.msra.mxu0 0.0
    %73 = vmatprep.subr.mxu0 0.0
    %74 = vmatpush1.msra.mxu0 0.0
    %75 = vmatprep.subr.mxu0 0.0
    %76 = vmatpush1.msra.mxu0 0.0
    %77 = vmatprep.subr.mxu0 0.0
    %78 = vmatpush1.msra.mxu0 0.0
    %79 = vmatprep.subr.mxu0 0.0
    %80 = vmatpush1.msra.mxu0 0.0
    %81 = vmatprep.subr.mxu0 0.0
    %82 = vmatpush1.msra.mxu0 0.0
    %83 = vmatprep.subr.mxu0 0.0
    %84 = vmatpush1.msra.mxu0 0.0
    %85 = vmatprep.subr.mxu0 0.0
    %86 = vmatpush1.msra.mxu0 0.0
    %87 = vmatprep.subr.mxu0 0.0
    %88 = vmatpush1.msra.mxu0 0.0
    %89 = vmatprep.subr.mxu0 0.0
    %90 = vmatpush1.msra.mxu0 0.0
    %91 = vmatprep.subr.mxu0 0.0
    %92 = vmatpush1.msra.mxu0 0.0
    %93 = vmatprep.subr.mxu0 0.0
    %94 = vmatpush1.msra.mxu0 0.0
    %95 = vmatprep.subr.mxu0 0.0
    %96 = vmatpush1.msra.mxu0 0.0
    %97 = vmatprep.subr.mxu0 0.0
    %98 = vmatpush1.msra.mxu0 0.0
    %99 = vmatprep.subr.mxu0 0.0
    %100 = vmatpush1.msra.mxu0 0.0
    %101 = vmatprep.subr.mxu0 0.0
    %102 = vmatpush1.msra.mxu0 0.0
    %103 = vmatprep.subr.mxu0 0.0
    %104 = vmatpush1.msra.mxu0 0.0
    %105 = vmatprep.subr.mxu0 0.0
    %106 = vmatpush1.msra.mxu0 0.0
    %107 = vmatprep.subr.mxu0 0.0
    %108 = vmatpush1.msra.mxu0 0.0
    %109 = vmatprep.subr.mxu0 0.0
    %110 = vmatpush1.msra.mxu0 0.0
    %111 = vmatprep.subr.mxu0 0.0
    %112 = vmatpush1.msra.mxu0 0.0
    %113 = vmatprep.subr.mxu0 0.0
    %114 = vmatpush1.msra.mxu0 0.0
    %115 = vmatprep.subr.mxu0 0.0
    %116 = vmatpush1.msra.mxu0 0.0
    %117 = vmatprep.subr.mxu0 0.0
    %118 = vmatpush1.msra.mxu0 0.0
    %119 = vmatprep.subr.mxu0 0.0
    %120 = vmatpush1.msra.mxu0 0.0
    %121 = vmatprep.subr.mxu0 0.0
    %122 = vmatpush1.msra.mxu0 0.0
    %123 = vmatprep.subr.mxu0 0.0
    %124 = vmatpush1.msra.mxu0 0.0
    %125 = vmatprep.subr.mxu0 0.0
    %126 = vmatpush1.msra.mxu0 0.0
    %127 = vmatprep.mubr.f32.mxu0 0.0
    %128 = vmatmul.mubr.f32.gmra.mrb[0].mxu0 %v58
    %v129 = vpop.f32.mrb[0].mxu0
    %v130 = vadd.f32 %v54, %v129
    %v131 = vpop.f32.mrb[0].mxu0
    %132 = vmatprep.mubr.f32.mxu0 0.0
    %133 = vmatmul.mubr.f32.gmra.mrb[0].mxu0 %v61
    %v134 = vpop.f32.mrb[0].mxu0
    %v135 = vadd.f32 %v54, %v134
    %v136 = vpop.f32.mrb[0].mxu0
    %137 = vdwg.mxu0
    %139 = vrot.lane.b32.xlu0 %v130, 96
    %v140 = vpop.permute.xlu0 %139
    %vm141 = vcmask 64512
    %v142 = vsel %vm141, %v130, 0
    %v144 = vsel %vm141, %v140, 0
    %146 = vmatprep.subr.mxu0 0.0
    %147 = vmatpush1.xpose.msra.mxu0 %v144
    %148 = vmatprep.subr.mxu0 0.0
    %149 = vmatpush1.xpose.msra.mxu0 0.0
    %150 = vmatprep.subr.mxu0 0.0
    %151 = vmatpush1.xpose.msra.mxu0 0.0
    %152 = vmatprep.subr.mxu0 0.0
    %153 = vmatpush1.xpose.msra.mxu0 0.0
    %154 = vmatprep.subr.mxu0 0.0
    %155 = vmatpush1.xpose.msra.mxu0 0.0
    %156 = vmatprep.subr.mxu0 0.0
    %157 = vmatpush1.xpose.msra.mxu0 0.0
    %158 = vmatprep.subr.mxu0 0.0
    %159 = vmatpush1.xpose.msra.mxu0 0.0
    %160 = vmatprep.subr.mxu0 0.0
    %161 = vmatpush1.xpose.msra.mxu0 0.0
    %162 = vmatprep.subr.mxu0 0.0
    %163 = vmatpush1.xpose.msra.mxu0 0.0
    %164 = vmatprep.subr.mxu0 0.0
    %165 = vmatpush1.xpose.msra.mxu0 0.0
    %166 = vmatprep.subr.mxu0 0.0
    %167 = vmatpush1.xpose.msra.mxu0 0.0
    %168 = vmatprep.subr.mxu0 0.0
    %169 = vmatpush1.xpose.msra.mxu0 0.0
    %170 = vmatprep.subr.mxu0 0.0
    %171 = vmatpush1.xpose.msra.mxu0 0.0
    %172 = vmatprep.subr.mxu0 0.0
    %173 = vmatpush1.xpose.msra.mxu0 0.0
    %174 = vmatprep.subr.mxu0 0.0
    %175 = vmatpush1.xpose.msra.mxu0 0.0
    %176 = vmatprep.subr.mxu0 0.0
    %177 = vmatpush1.xpose.msra.mxu0 0.0
    %178 = vmatprep.subr.mxu0 0.0
    %179 = vmatpush1.xpose.msra.mxu0 0.0
    %180 = vmatprep.subr.mxu0 0.0
    %181 = vmatpush1.xpose.msra.mxu0 0.0
    %182 = vmatprep.subr.mxu0 0.0
    %183 = vmatpush1.xpose.msra.mxu0 0.0
    %184 = vmatprep.subr.mxu0 0.0
    %185 = vmatpush1.xpose.msra.mxu0 0.0
    %186 = vmatprep.subr.mxu0 0.0
    %187 = vmatpush1.xpose.msra.mxu0 0.0
    %188 = vmatprep.subr.mxu0 0.0
    %189 = vmatpush1.xpose.msra.mxu0 0.0
    %190 = vmatprep.subr.mxu0 0.0
    %191 = vmatpush1.xpose.msra.mxu0 0.0
    %192 = vmatprep.subr.mxu0 0.0
    %193 = vmatpush1.xpose.msra.mxu0 0.0
    %194 = vmatprep.subr.mxu0 0.0
    %195 = vmatpush1.xpose.msra.mxu0 0.0
    %196 = vmatprep.subr.mxu0 0.0
    %197 = vmatpush1.xpose.msra.mxu0 0.0
    %198 = vmatprep.subr.mxu0 0.0
    %199 = vmatpush1.xpose.msra.mxu0 0.0
    %200 = vmatprep.subr.mxu0 0.0
    %201 = vmatpush1.xpose.msra.mxu0 0.0
    %202 = vmatprep.subr.mxu0 0.0
    %203 = vmatpush1.xpose.msra.mxu0 0.0
    %204 = vmatprep.subr.mxu0 0.0
    %205 = vmatpush1.xpose.msra.mxu0 0.0
    %206 = vmatprep.subr.mxu0 0.0
    %207 = vmatpush1.xpose.msra.mxu0 0.0
    %208 = vmatprep.subr.mxu0 0.0
    %209 = vmatpush1.xpose.msra.mxu0 0.0
    %210 = vmatprep.mubr.f32.mxu0 0.0
    %211 = vmatmul.mubr.f32.gmra.mrb[0].mxu0 %v142
    %v212 = vpop.f32.mrb[0].mxu0
    %v213 = vadd.f32 0.0, %v212
    %v214 = vpop.f32.mrb[0].mxu0
    %215 = vdwg.mxu0
    %v216 = vsel %vm141, %v213, -inf
    %217 = vmax.xlane.f32.xlu0 %v216
    %v218 = vpop.xlane.xlu0 %217
    %v219 = vsub.f32 %v213, %v218
    %v220 = vmul.f32 %v219, 1.442695
    %v221 = vpow.pop %v220
    %v222 = vsel %vm141, %v221, 0.0
    %223 = vadd.xlane.f32.xlu0 %v222
    %v224 = vpop.xlane.xlu0 %223
    %225 = vrot.lane.b32.xlu0 %v130, 64
    %v226 = vpop.permute.xlu0 %225
    %v229 = vsel %vm141, %v221, 0
    %231 = vmatprep.subr.mxu0 0.0
    %232 = vmatpush1.msra.mxu0 %v226
    %233 = vmatprep.subr.mxu0 0.0
    %234 = vmatpush1.msra.mxu0 0.0
    %235 = vmatprep.subr.mxu0 0.0
    %236 = vmatpush1.msra.mxu0 0.0
    %237 = vmatprep.subr.mxu0 0.0
    %238 = vmatpush1.msra.mxu0 0.0
    %239 = vmatprep.subr.mxu0 0.0
    %240 = vmatpush1.msra.mxu0 0.0
    %241 = vmatprep.subr.mxu0 0.0
    %242 = vmatpush1.msra.mxu0 0.0
    %243 = vmatprep.subr.mxu0 0.0
    %244 = vmatpush1.msra.mxu0 0.0
    %245 = vmatprep.subr.mxu0 0.0
    %246 = vmatpush1.msra.mxu0 0.0
    %247 = vmatprep.subr.mxu0 0.0
    %248 = vmatpush1.msra.mxu0 0.0
    %249 = vmatprep.subr.mxu0 0.0
    %250 = vmatpush1.msra.mxu0 0.0
    %251 = vmatprep.subr.mxu0 0.0
    %252 = vmatpush1.msra.mxu0 0.0
    %253 = vmatprep.subr.mxu0 0.0
    %254 = vmatpush1.msra.mxu0 0.0
    %255 = vmatprep.subr.mxu0 0.0
    %256 = vmatpush1.msra.mxu0 0.0
    %257 = vmatprep.subr.mxu0 0.0
    %258 = vmatpush1.msra.mxu0 0.0
    %259 = vmatprep.subr.mxu0 0.0
    %260 = vmatpush1.msra.mxu0 0.0
    %261 = vmatprep.subr.mxu0 0.0
    %262 = vmatpush1.msra.mxu0 0.0
    %263 = vmatprep.subr.mxu0 0.0
    %264 = vmatpush1.msra.mxu0 0.0
    %265 = vmatprep.subr.mxu0 0.0
    %266 = vmatpush1.msra.mxu0 0.0
    %267 = vmatprep.subr.mxu0 0.0
    %268 = vmatpush1.msra.mxu0 0.0
    %269 = vmatprep.subr.mxu0 0.0
    %270 = vmatpush1.msra.mxu0 0.0
    %271 = vmatprep.subr.mxu0 0.0
    %272 = vmatpush1.msra.mxu0 0.0
    %273 = vmatprep.subr.mxu0 0.0
    %274 = vmatpush1.msra.mxu0 0.0
    %275 = vmatprep.subr.mxu0 0.0
    %276 = vmatpush1.msra.mxu0 0.0
    %277 = vmatprep.subr.mxu0 0.0
    %278 = vmatpush1.msra.mxu0 0.0
    %279 = vmatprep.subr.mxu0 0.0
    %280 = vmatpush1.msra.mxu0 0.0
    %281 = vmatprep.subr.mxu0 0.0
    %282 = vmatpush1.msra.mxu0 0.0
    %283 = vmatprep.subr.mxu0 0.0
    %284 = vmatpush1.msra.mxu0 0.0
    %285 = vmatprep.subr.mxu0 0.0
    %286 = vmatpush1.msra.mxu0 0.0
    %287 = vmatprep.subr.mxu0 0.0
    %288 = vmatpush1.msra.mxu0 0.0
    %289 = vmatprep.subr.mxu0 0.0
    %290 = vmatpush1.msra.mxu0 0.0
    %291 = vmatprep.subr.mxu0 0.0
    %292 = vmatpush1.msra.mxu0 0.0
    %293 = vmatprep.subr.mxu0 0.0
    %294 = vmatpush1.msra.mxu0 0.0
    %295 = vmatprep.mubr.f32.mxu0 0.0
    %296 = vmatmul.mubr.f32.gmra.mrb[0].mxu0 %v229
    %v297 = vpop.f32.mrb[0].mxu0
    %v298 = vadd.f32 0.0, %v297
    %v299 = vpop.f32.mrb[0].mxu0
    %300 = vdwg.mxu0
    %v301 = vrcp.pop %v224
    %v302 = vmul.f32 %v298, %v301
    %303 = vst.msk [vmem:[#allocation2] sm:$0xff] %vm141, %v302
    %304 = vrot.lane.b32.xlu0 %v130, 120
    %v305 = vpop.permute.xlu0 %304
    %306 = vrot.lane.b32.xlu0 %v130, 88
    %v307 = vpop.permute.xlu0 %306
    %v308 = vsel %vm141, %v305, 0
    %v310 = vsel %vm141, %v307, 0
    %312 = vmatprep.subr.mxu0 0.0
    %313 = vmatpush1.xpose.msra.mxu0 %v310
    %314 = vmatprep.subr.mxu0 0.0
    %315 = vmatpush1.xpose.msra.mxu0 0.0
    %316 = vmatprep.subr.mxu0 0.0
    %317 = vmatpush1.xpose.msra.mxu0 0.0
    %318 = vmatprep.subr.mxu0 0.0
    %319 = vmatpush1.xpose.msra.mxu0 0.0
    %320 = vmatprep.subr.mxu0 0.0
    %321 = vmatpush1.xpose.msra.mxu0 0.0
    %322 = vmatprep.subr.mxu0 0.0
    %323 = vmatpush1.xpose.msra.mxu0 0.0
    %324 = vmatprep.subr.mxu0 0.0
    %325 = vmatpush1.xpose.msra.mxu0 0.0
    %326 = vmatprep.subr.mxu0 0.0
    %327 = vmatpush1.xpose.msra.mxu0 0.0
    %328 = vmatprep.subr.mxu0 0.0
    %329 = vmatpush1.xpose.msra.mxu0 0.0
    %330 = vmatprep.subr.mxu0 0.0
    %331 = vmatpush1.xpose.msra.mxu0 0.0
    %332 = vmatprep.subr.mxu0 0.0
    %333 = vmatpush1.xpose.msra.mxu0 0.0
    %334 = vmatprep.subr.mxu0 0.0
    %335 = vmatpush1.xpose.msra.mxu0 0.0
    %336 = vmatprep.subr.mxu0 0.0
    %337 = vmatpush1.xpose.msra.mxu0 0.0
    %338 = vmatprep.subr.mxu0 0.0
    %339 = vmatpush1.xpose.msra.mxu0 0.0
    %340 = vmatprep.subr.mxu0 0.0
    %341 = vmatpush1.xpose.msra.mxu0 0.0
    %342 = vmatprep.subr.mxu0 0.0
    %343 = vmatpush1.xpose.msra.mxu0 0.0
    %344 = vmatprep.subr.mxu0 0.0
    %345 = vmatpush1.xpose.msra.mxu0 0.0
    %346 = vmatprep.subr.mxu0 0.0
    %347 = vmatpush1.xpose.msra.mxu0 0.0
    %348 = vmatprep.subr.mxu0 0.0
    %349 = vmatpush1.xpose.msra.mxu0 0.0
    %350 = vmatprep.subr.mxu0 0.0
    %351 = vmatpush1.xpose.msra.mxu0 0.0
    %352 = vmatprep.subr.mxu0 0.0
    %353 = vmatpush1.xpose.msra.mxu0 0.0
    %354 = vmatprep.subr.mxu0 0.0
    %355 = vmatpush1.xpose.msra.mxu0 0.0
    %356 = vmatprep.subr.mxu0 0.0
    %357 = vmatpush1.xpose.msra.mxu0 0.0
    %358 = vmatprep.subr.mxu0 0.0
    %359 = vmatpush1.xpose.msra.mxu0 0.0
    %360 = vmatprep.subr.mxu0 0.0
    %361 = vmatpush1.xpose.msra.mxu0 0.0
    %362 = vmatprep.subr.mxu0 0.0
    %363 = vmatpush1.xpose.msra.mxu0 0.0
    %364 = vmatprep.subr.mxu0 0.0
    %365 = vmatpush1.xpose.msra.mxu0 0.0
    %366 = vmatprep.subr.mxu0 0.0
    %367 = vmatpush1.xpose.msra.mxu0 0.0
    %368 = vmatprep.subr.mxu0 0.0
    %369 = vmatpush1.xpose.msra.mxu0 0.0
    %370 = vmatprep.subr.mxu0 0.0
    %371 = vmatpush1.xpose.msra.mxu0 0.0
    %372 = vmatprep.subr.mxu0 0.0
    %373 = vmatpush1.xpose.msra.mxu0 0.0
    %374 = vmatprep.subr.mxu0 0.0
    %375 = vmatpush1.xpose.msra.mxu0 0.0
    %376 = vmatprep.mubr.f32.mxu0 0.0
    %377 = vmatmul.mubr.f32.gmra.mrb[0].mxu0 %v308
    %v378 = vpop.f32.mrb[0].mxu0
    %v379 = vadd.f32 0.0, %v378
    %v380 = vpop.f32.mrb[0].mxu0
    %381 = vdwg.mxu0
    %v382 = vsel %vm141, %v379, -inf
    %383 = vmax.xlane.f32.xlu0 %v382
    %v384 = vpop.xlane.xlu0 %383
    %v385 = vsub.f32 %v379, %v384
    %v386 = vmul.f32 %v385, 1.442695
    %v387 = vpow.pop %v386
    %v388 = vsel %vm141, %v387, 0.0
    %389 = vadd.xlane.f32.xlu0 %v388
    %v390 = vpop.xlane.xlu0 %389
    %391 = vrot.lane.b32.xlu0 %v130, 56
    %v392 = vpop.permute.xlu0 %391
    %v395 = vsel %vm141, %v387, 0
    %397 = vmatprep.subr.mxu0 0.0
    %398 = vmatpush1.msra.mxu0 %v392
    %399 = vmatprep.subr.mxu0 0.0
    %400 = vmatpush1.msra.mxu0 0.0
    %401 = vmatprep.subr.mxu0 0.0
    %402 = vmatpush1.msra.mxu0 0.0
    %403 = vmatprep.subr.mxu0 0.0
    %404 = vmatpush1.msra.mxu0 0.0
    %405 = vmatprep.subr.mxu0 0.0
    %406 = vmatpush1.msra.mxu0 0.0
    %407 = vmatprep.subr.mxu0 0.0
    %408 = vmatpush1.msra.mxu0 0.0
    %409 = vmatprep.subr.mxu0 0.0
    %410 = vmatpush1.msra.mxu0 0.0
    %411 = vmatprep.subr.mxu0 0.0
    %412 = vmatpush1.msra.mxu0 0.0
    %413 = vmatprep.subr.mxu0 0.0
    %414 = vmatpush1.msra.mxu0 0.0
    %415 = vmatprep.subr.mxu0 0.0
    %416 = vmatpush1.msra.mxu0 0.0
    %417 = vmatprep.subr.mxu0 0.0
    %418 = vmatpush1.msra.mxu0 0.0
    %419 = vmatprep.subr.mxu0 0.0
    %420 = vmatpush1.msra.mxu0 0.0
    %421 = vmatprep.subr.mxu0 0.0
    %422 = vmatpush1.msra.mxu0 0.0
    %423 = vmatprep.subr.mxu0 0.0
    %424 = vmatpush1.msra.mxu0 0.0
    %425 = vmatprep.subr.mxu0 0.0
    %426 = vmatpush1.msra.mxu0 0.0
    %427 = vmatprep.subr.mxu0 0.0
    %428 = vmatpush1.msra.mxu0 0.0
    %429 = vmatprep.subr.mxu0 0.0
    %430 = vmatpush1.msra.mxu0 0.0
    %431 = vmatprep.subr.mxu0 0.0
    %432 = vmatpush1.msra.mxu0 0.0
    %433 = vmatprep.subr.mxu0 0.0
    %434 = vmatpush1.msra.mxu0 0.0
    %435 = vmatprep.subr.mxu0 0.0
    %436 = vmatpush1.msra.mxu0 0.0
    %437 = vmatprep.subr.mxu0 0.0
    %438 = vmatpush1.msra.mxu0 0.0
    %439 = vmatprep.subr.mxu0 0.0
    %440 = vmatpush1.msra.mxu0 0.0
    %441 = vmatprep.subr.mxu0 0.0
    %442 = vmatpush1.msra.mxu0 0.0
    %443 = vmatprep.subr.mxu0 0.0
    %444 = vmatpush1.msra.mxu0 0.0
    %445 = vmatprep.subr.mxu0 0.0
    %446 = vmatpush1.msra.mxu0 0.0
    %447 = vmatprep.subr.mxu0 0.0
    %448 = vmatpush1.msra.mxu0 0.0
    %449 = vmatprep.subr.mxu0 0.0
    %450 = vmatpush1.msra.mxu0 0.0
    %451 = vmatprep.subr.mxu0 0.0
    %452 = vmatpush1.msra.mxu0 0.0
    %453 = vmatprep.subr.mxu0 0.0
    %454 = vmatpush1.msra.mxu0 0.0
    %455 = vmatprep.subr.mxu0 0.0
    %456 = vmatpush1.msra.mxu0 0.0
    %457 = vmatprep.subr.mxu0 0.0
    %458 = vmatpush1.msra.mxu0 0.0
    %459 = vmatprep.subr.mxu0 0.0
    %460 = vmatpush1.msra.mxu0 0.0
    %461 = vmatprep.mubr.f32.mxu0 0.0
    %462 = vmatmul.mubr.f32.gmra.mrb[0].mxu0 %v395
    %v463 = vpop.f32.mrb[0].mxu0
    %v464 = vadd.f32 0.0, %v463
    %v465 = vpop.f32.mrb[0].mxu0
    %466 = vdwg.mxu0
    %v467 = vrcp.pop %v390
    %v468 = vmul.f32 %v464, %v467
    %470 = vrot.lane.b32.xlu0 %v468, 8
    %v471 = vpop.permute.xlu0 %470
    %vm473 = vcmask 130112
    %474 = vst.msk [vmem:[#allocation2] sm:$0xff] %vm473, %v471
    %475 = vrot.lane.b32.xlu0 %v130, 112
    %v476 = vpop.permute.xlu0 %475
    %477 = vrot.lane.b32.xlu0 %v130, 80
    %v478 = vpop.permute.xlu0 %477
    %v479 = vsel %vm141, %v476, 0
    %v481 = vsel %vm141, %v478, 0
    %483 = vmatprep.subr.mxu0 0.0
    %484 = vmatpush1.xpose.msra.mxu0 %v481
    %485 = vmatprep.subr.mxu0 0.0
    %486 = vmatpush1.xpose.msra.mxu0 0.0
    %487 = vmatprep.subr.mxu0 0.0
    %488 = vmatpush1.xpose.msra.mxu0 0.0
    %489 = vmatprep.subr.mxu0 0.0
    %490 = vmatpush1.xpose.msra.mxu0 0.0
    %491 = vmatprep.subr.mxu0 0.0
    %492 = vmatpush1.xpose.msra.mxu0 0.0
    %493 = vmatprep.subr.mxu0 0.0
    %494 = vmatpush1.xpose.msra.mxu0 0.0
    %495 = vmatprep.subr.mxu0 0.0
    %496 = vmatpush1.xpose.msra.mxu0 0.0
    %497 = vmatprep.subr.mxu0 0.0
    %498 = vmatpush1.xpose.msra.mxu0 0.0
    %499 = vmatprep.subr.mxu0 0.0
    %500 = vmatpush1.xpose.msra.mxu0 0.0
    %501 = vmatprep.subr.mxu0 0.0
    %502 = vmatpush1.xpose.msra.mxu0 0.0
    %503 = vmatprep.subr.mxu0 0.0
    %504 = vmatpush1.xpose.msra.mxu0 0.0
    %505 = vmatprep.subr.mxu0 0.0
    %506 = vmatpush1.xpose.msra.mxu0 0.0
    %507 = vmatprep.subr.mxu0 0.0
    %508 = vmatpush1.xpose.msra.mxu0 0.0
    %509 = vmatprep.subr.mxu0 0.0
    %510 = vmatpush1.xpose.msra.mxu0 0.0
    %511 = vmatprep.subr.mxu0 0.0
    %512 = vmatpush1.xpose.msra.mxu0 0.0
    %513 = vmatprep.subr.mxu0 0.0
    %514 = vmatpush1.xpose.msra.mxu0 0.0
    %515 = vmatprep.subr.mxu0 0.0
    %516 = vmatpush1.xpose.msra.mxu0 0.0
    %517 = vmatprep.subr.mxu0 0.0
    %518 = vmatpush1.xpose.msra.mxu0 0.0
    %519 = vmatprep.subr.mxu0 0.0
    %520 = vmatpush1.xpose.msra.mxu0 0.0
    %521 = vmatprep.subr.mxu0 0.0
    %522 = vmatpush1.xpose.msra.mxu0 0.0
    %523 = vmatprep.subr.mxu0 0.0
    %524 = vmatpush1.xpose.msra.mxu0 0.0
    %525 = vmatprep.subr.mxu0 0.0
    %526 = vmatpush1.xpose.msra.mxu0 0.0
    %527 = vmatprep.subr.mxu0 0.0
    %528 = vmatpush1.xpose.msra.mxu0 0.0
    %529 = vmatprep.subr.mxu0 0.0
    %530 = vmatpush1.xpose.msra.mxu0 0.0
    %531 = vmatprep.subr.mxu0 0.0
    %532 = vmatpush1.xpose.msra.mxu0 0.0
    %533 = vmatprep.subr.mxu0 0.0
    %534 = vmatpush1.xpose.msra.mxu0 0.0
    %535 = vmatprep.subr.mxu0 0.0
    %536 = vmatpush1.xpose.msra.mxu0 0.0
    %537 = vmatprep.subr.mxu0 0.0
    %538 = vmatpush1.xpose.msra.mxu0 0.0
    %539 = vmatprep.subr.mxu0 0.0
    %540 = vmatpush1.xpose.msra.mxu0 0.0
    %541 = vmatprep.subr.mxu0 0.0
    %542 = vmatpush1.xpose.msra.mxu0 0.0
    %543 = vmatprep.subr.mxu0 0.0
    %544 = vmatpush1.xpose.msra.mxu0 0.0
    %545 = vmatprep.subr.mxu0 0.0
    %546 = vmatpush1.xpose.msra.mxu0 0.0
    %547 = vmatprep.mubr.f32.mxu0 0.0
    %548 = vmatmul.mubr.f32.gmra.mrb[0].mxu0 %v479
    %v549 = vpop.f32.mrb[0].mxu0
    %v550 = vadd.f32 0.0, %v549
    %v551 = vpop.f32.mrb[0].mxu0
    %552 = vdwg.mxu0
    %v553 = vsel %vm141, %v550, -inf
    %554 = vmax.xlane.f32.xlu0 %v553
    %v555 = vpop.xlane.xlu0 %554
    %v556 = vsub.f32 %v550, %v555
    %v557 = vmul.f32 %v556, 1.442695
    %v558 = vpow.pop %v557
    %v559 = vsel %vm141, %v558, 0.0
    %560 = vadd.xlane.f32.xlu0 %v559
    %v561 = vpop.xlane.xlu0 %560
    %562 = vrot.lane.b32.xlu0 %v130, 48
    %v563 = vpop.permute.xlu0 %562
    %v566 = vsel %vm141, %v558, 0
    %568 = vmatprep.subr.mxu0 0.0
    %569 = vmatpush1.msra.mxu0 %v563
    %570 = vmatprep.subr.mxu0 0.0
    %571 = vmatpush1.msra.mxu0 0.0
    %572 = vmatprep.subr.mxu0 0.0
    %573 = vmatpush1.msra.mxu0 0.0
    %574 = vmatprep.subr.mxu0 0.0
    %575 = vmatpush1.msra.mxu0 0.0
    %576 = vmatprep.subr.mxu0 0.0
    %577 = vmatpush1.msra.mxu0 0.0
    %578 = vmatprep.subr.mxu0 0.0
    %579 = vmatpush1.msra.mxu0 0.0
    %580 = vmatprep.subr.mxu0 0.0
    %581 = vmatpush1.msra.mxu0 0.0
    %582 = vmatprep.subr.mxu0 0.0
    %583 = vmatpush1.msra.mxu0 0.0
    %584 = vmatprep.subr.mxu0 0.0
    %585 = vmatpush1.msra.mxu0 0.0
    %586 = vmatprep.subr.mxu0 0.0
    %587 = vmatpush1.msra.mxu0 0.0
    %588 = vmatprep.subr.mxu0 0.0
    %589 = vmatpush1.msra.mxu0 0.0
    %590 = vmatprep.subr.mxu0 0.0
    %591 = vmatpush1.msra.mxu0 0.0
    %592 = vmatprep.subr.mxu0 0.0
    %593 = vmatpush1.msra.mxu0 0.0
    %594 = vmatprep.subr.mxu0 0.0
    %595 = vmatpush1.msra.mxu0 0.0
    %596 = vmatprep.subr.mxu0 0.0
    %597 = vmatpush1.msra.mxu0 0.0
    %598 = vmatprep.subr.mxu0 0.0
    %599 = vmatpush1.msra.mxu0 0.0
    %600 = vmatprep.subr.mxu0 0.0
    %601 = vmatpush1.msra.mxu0 0.0
    %602 = vmatprep.subr.mxu0 0.0
    %603 = vmatpush1.msra.mxu0 0.0
    %604 = vmatprep.subr.mxu0 0.0
    %605 = vmatpush1.msra.mxu0 0.0
    %606 = vmatprep.subr.mxu0 0.0
    %607 = vmatpush1.msra.mxu0 0.0
    %608 = vmatprep.subr.mxu0 0.0
    %609 = vmatpush1.msra.mxu0 0.0
    %610 = vmatprep.subr.mxu0 0.0
    %611 = vmatpush1.msra.mxu0 0.0
    %612 = vmatprep.subr.mxu0 0.0
    %613 = vmatpush1.msra.mxu0 0.0
    %614 = vmatprep.subr.mxu0 0.0
    %615 = vmatpush1.msra.mxu0 0.0
    %616 = vmatprep.subr.mxu0 0.0
    %617 = vmatpush1.msra.mxu0 0.0
    %618 = vmatprep.subr.mxu0 0.0
    %619 = vmatpush1.msra.mxu0 0.0
    %620 = vmatprep.subr.mxu0 0.0
    %621 = vmatpush1.msra.mxu0 0.0
    %622 = vmatprep.subr.mxu0 0.0
    %623 = vmatpush1.msra.mxu0 0.0
    %624 = vmatprep.subr.mxu0 0.0
    %625 = vmatpush1.msra.mxu0 0.0
    %626 = vmatprep.subr.mxu0 0.0
    %627 = vmatpush1.msra.mxu0 0.0
    %628 = vmatprep.subr.mxu0 0.0
    %629 = vmatpush1.msra.mxu0 0.0
    %630 = vmatprep.subr.mxu0 0.0
    %631 = vmatpush1.msra.mxu0 0.0
    %632 = vmatprep.mubr.f32.mxu0 0.0
    %633 = vmatmul.mubr.f32.gmra.mrb[0].mxu0 %v566
    %v634 = vpop.f32.mrb[0].mxu0
    %v635 = vadd.f32 0.0, %v634
    %v636 = vpop.f32.mrb[0].mxu0
    %637 = vdwg.mxu0
    %v638 = vrcp.pop %v561
    %v639 = vmul.f32 %v635, %v638
    %641 = vrot.lane.b32.xlu0 %v639, 16
    %v642 = vpop.permute.xlu0 %641
    %vm644 = vcmask 195712
    %645 = vst.msk [vmem:[#allocation2] sm:$0xff] %vm644, %v642
    %646 = vrot.lane.b32.xlu0 %v130, 104
    %v647 = vpop.permute.xlu0 %646
    %648 = vrot.lane.b32.xlu0 %v130, 72
    %v649 = vpop.permute.xlu0 %648
    %v650 = vsel %vm141, %v647, 0
    %v652 = vsel %vm141, %v649, 0
    %654 = vmatprep.subr.mxu0 0.0
    %655 = vmatpush1.xpose.msra.mxu0 %v652
    %656 = vmatprep.subr.mxu0 0.0
    %657 = vmatpush1.xpose.msra.mxu0 0.0
    %658 = vmatprep.subr.mxu0 0.0
    %659 = vmatpush1.xpose.msra.mxu0 0.0
    %660 = vmatprep.subr.mxu0 0.0
    %661 = vmatpush1.xpose.msra.mxu0 0.0
    %662 = vmatprep.subr.mxu0 0.0
    %663 = vmatpush1.xpose.msra.mxu0 0.0
    %664 = vmatprep.subr.mxu0 0.0
    %665 = vmatpush1.xpose.msra.mxu0 0.0
    %666 = vmatprep.subr.mxu0 0.0
    %667 = vmatpush1.xpose.msra.mxu0 0.0
    %668 = vmatprep.subr.mxu0 0.0
    %669 = vmatpush1.xpose.msra.mxu0 0.0
    %670 = vmatprep.subr.mxu0 0.0
    %671 = vmatpush1.xpose.msra.mxu0 0.0
    %672 = vmatprep.subr.mxu0 0.0
    %673 = vmatpush1.xpose.msra.mxu0 0.0
    %674 = vmatprep.subr.mxu0 0.0
    %675 = vmatpush1.xpose.msra.mxu0 0.0
    %676 = vmatprep.subr.mxu0 0.0
    %677 = vmatpush1.xpose.msra.mxu0 0.0
    %678 = vmatprep.subr.mxu0 0.0
    %679 = vmatpush1.xpose.msra.mxu0 0.0
    %680 = vmatprep.subr.mxu0 0.0
    %681 = vmatpush1.xpose.msra.mxu0 0.0
    %682 = vmatprep.subr.mxu0 0.0
    %683 = vmatpush1.xpose.msra.mxu0 0.0
    %684 = vmatprep.subr.mxu0 0.0
    %685 = vmatpush1.xpose.msra.mxu0 0.0
    %686 = vmatprep.subr.mxu0 0.0
    %687 = vmatpush1.xpose.msra.mxu0 0.0
    %688 = vmatprep.subr.mxu0 0.0
    %689 = vmatpush1.xpose.msra.mxu0 0.0
    %690 = vmatprep.subr.mxu0 0.0
    %691 = vmatpush1.xpose.msra.mxu0 0.0
    %692 = vmatprep.subr.mxu0 0.0
    %693 = vmatpush1.xpose.msra.mxu0 0.0
    %694 = vmatprep.subr.mxu0 0.0
    %695 = vmatpush1.xpose.msra.mxu0 0.0
    %696 = vmatprep.subr.mxu0 0.0
    %697 = vmatpush1.xpose.msra.mxu0 0.0
    %698 = vmatprep.subr.mxu0 0.0
    %699 = vmatpush1.xpose.msra.mxu0 0.0
    %700 = vmatprep.subr.mxu0 0.0
    %701 = vmatpush1.xpose.msra.mxu0 0.0
    %702 = vmatprep.subr.mxu0 0.0
    %703 = vmatpush1.xpose.msra.mxu0 0.0
    %704 = vmatprep.subr.mxu0 0.0
    %705 = vmatpush1.xpose.msra.mxu0 0.0
    %706 = vmatprep.subr.mxu0 0.0
    %707 = vmatpush1.xpose.msra.mxu0 0.0
    %708 = vmatprep.subr.mxu0 0.0
    %709 = vmatpush1.xpose.msra.mxu0 0.0
    %710 = vmatprep.subr.mxu0 0.0
    %711 = vmatpush1.xpose.msra.mxu0 0.0
    %712 = vmatprep.subr.mxu0 0.0
    %713 = vmatpush1.xpose.msra.mxu0 0.0
    %714 = vmatprep.subr.mxu0 0.0
    %715 = vmatpush1.xpose.msra.mxu0 0.0
    %716 = vmatprep.subr.mxu0 0.0
    %717 = vmatpush1.xpose.msra.mxu0 0.0
    %718 = vmatprep.mubr.f32.mxu0 0.0
    %719 = vmatmul.mubr.f32.gmra.mrb[0].mxu0 %v650
    %v720 = vpop.f32.mrb[0].mxu0
    %v721 = vadd.f32 0.0, %v720
    %v722 = vpop.f32.mrb[0].mxu0
    %723 = vdwg.mxu0
    %v724 = vsel %vm141, %v721, -inf
    %725 = vmax.xlane.f32.xlu0 %v724
    %v726 = vpop.xlane.xlu0 %725
    %v727 = vsub.f32 %v721, %v726
    %v728 = vmul.f32 %v727, 1.442695
    %v729 = vpow.pop %v728
    %v730 = vsel %vm141, %v729, 0.0
    %731 = vadd.xlane.f32.xlu0 %v730
    %v732 = vpop.xlane.xlu0 %731
    %733 = vrot.lane.b32.xlu0 %v130, 40
    %v734 = vpop.permute.xlu0 %733
    %v737 = vsel %vm141, %v729, 0
    %739 = vmatprep.subr.mxu0 0.0
    %740 = vmatpush1.msra.mxu0 %v734
    %741 = vmatprep.subr.mxu0 0.0
    %742 = vmatpush1.msra.mxu0 0.0
    %743 = vmatprep.subr.mxu0 0.0
    %744 = vmatpush1.msra.mxu0 0.0
    %745 = vmatprep.subr.mxu0 0.0
    %746 = vmatpush1.msra.mxu0 0.0
    %747 = vmatprep.subr.mxu0 0.0
    %748 = vmatpush1.msra.mxu0 0.0
    %749 = vmatprep.subr.mxu0 0.0
    %750 = vmatpush1.msra.mxu0 0.0
    %751 = vmatprep.subr.mxu0 0.0
    %752 = vmatpush1.msra.mxu0 0.0
    %753 = vmatprep.subr.mxu0 0.0
    %754 = vmatpush1.msra.mxu0 0.0
    %755 = vmatprep.subr.mxu0 0.0
    %756 = vmatpush1.msra.mxu0 0.0
    %757 = vmatprep.subr.mxu0 0.0
    %758 = vmatpush1.msra.mxu0 0.0
    %759 = vmatprep.subr.mxu0 0.0
    %760 = vmatpush1.msra.mxu0 0.0
    %761 = vmatprep.subr.mxu0 0.0
    %762 = vmatpush1.msra.mxu0 0.0
    %763 = vmatprep.subr.mxu0 0.0
    %764 = vmatpush1.msra.mxu0 0.0
    %765 = vmatprep.subr.mxu0 0.0
    %766 = vmatpush1.msra.mxu0 0.0
    %767 = vmatprep.subr.mxu0 0.0
    %768 = vmatpush1.msra.mxu0 0.0
    %769 = vmatprep.subr.mxu0 0.0
    %770 = vmatpush1.msra.mxu0 0.0
    %771 = vmatprep.subr.mxu0 0.0
    %772 = vmatpush1.msra.mxu0 0.0
    %773 = vmatprep.subr.mxu0 0.0
    %774 = vmatpush1.msra.mxu0 0.0
    %775 = vmatprep.subr.mxu0 0.0
    %776 = vmatpush1.msra.mxu0 0.0
    %777 = vmatprep.subr.mxu0 0.0
    %778 = vmatpush1.msra.mxu0 0.0
    %779 = vmatprep.subr.mxu0 0.0
    %780 = vmatpush1.msra.mxu0 0.0
    %781 = vmatprep.subr.mxu0 0.0
    %782 = vmatpush1.msra.mxu0 0.0
    %783 = vmatprep.subr.mxu0 0.0
    %784 = vmatpush1.msra.mxu0 0.0
    %785 = vmatprep.subr.mxu0 0.0
    %786 = vmatpush1.msra.mxu0 0.0
    %787 = vmatprep.subr.mxu0 0.0
    %788 = vmatpush1.msra.mxu0 0.0
    %789 = vmatprep.subr.mxu0 0.0
    %790 = vmatpush1.msra.mxu0 0.0
    %791 = vmatprep.subr.mxu0 0.0
    %792 = vmatpush1.msra.mxu0 0.0
    %793 = vmatprep.subr.mxu0 0.0
    %794 = vmatpush1.msra.mxu0 0.0
    %795 = vmatprep.subr.mxu0 0.0
    %796 = vmatpush1.msra.mxu0 0.0
    %797 = vmatprep.subr.mxu0 0.0
    %798 = vmatpush1.msra.mxu0 0.0
    %799 = vmatprep.subr.mxu0 0.0
    %800 = vmatpush1.msra.mxu0 0.0
    %801 = vmatprep.subr.mxu0 0.0
    %802 = vmatpush1.msra.mxu0 0.0
    %803 = vmatprep.mubr.f32.mxu0 0.0
    %804 = vmatmul.mubr.f32.gmra.mrb[0].mxu0 %v737
    %v805 = vpop.f32.mrb[0].mxu0
    %v806 = vadd.f32 0.0, %v805
    %v807 = vpop.f32.mrb[0].mxu0
    %808 = vdwg.mxu0
    %v809 = vrcp.pop %v732
    %v810 = vmul.f32 %v806, %v809
    %812 = vrot.lane.b32.xlu0 %v810, 24
    %v813 = vpop.permute.xlu0 %812
    %vm815 = vcmask 261312
    %816 = vst.msk [vmem:[#allocation2] sm:$0xff] %vm815, %v813
    %818 = vrot.lane.b32.xlu0 %v135, 96
    %v819 = vpop.permute.xlu0 %818
    %v820 = vsel %vm141, %v135, 0
    %v822 = vsel %vm141, %v819, 0
    %824 = vmatprep.subr.mxu0 0.0
    %825 = vmatpush1.xpose.msra.mxu0 %v822
    %826 = vmatprep.subr.mxu0 0.0
    %827 = vmatpush1.xpose.msra.mxu0 0.0
    %828 = vmatprep.subr.mxu0 0.0
    %829 = vmatpush1.xpose.msra.mxu0 0.0
    %830 = vmatprep.subr.mxu0 0.0
    %831 = vmatpush1.xpose.msra.mxu0 0.0
    %832 = vmatprep.subr.mxu0 0.0
    %833 = vmatpush1.xpose.msra.mxu0 0.0
    %834 = vmatprep.subr.mxu0 0.0
    %835 = vmatpush1.xpose.msra.mxu0 0.0
    %836 = vmatprep.subr.mxu0 0.0
    %837 = vmatpush1.xpose.msra.mxu0 0.0
    %838 = vmatprep.subr.mxu0 0.0
    %839 = vmatpush1.xpose.msra.mxu0 0.0
    %840 = vmatprep.subr.mxu0 0.0
    %841 = vmatpush1.xpose.msra.mxu0 0.0
    %842 = vmatprep.subr.mxu0 0.0
    %843 = vmatpush1.xpose.msra.mxu0 0.0
    %844 = vmatprep.subr.mxu0 0.0
    %845 = vmatpush1.xpose.msra.mxu0 0.0
    %846 = vmatprep.subr.mxu0 0.0
    %847 = vmatpush1.xpose.msra.mxu0 0.0
    %848 = vmatprep.subr.mxu0 0.0
    %849 = vmatpush1.xpose.msra.mxu0 0.0
    %850 = vmatprep.subr.mxu0 0.0
    %851 = vmatpush1.xpose.msra.mxu0 0.0
    %852 = vmatprep.subr.mxu0 0.0
    %853 = vmatpush1.xpose.msra.mxu0 0.0
    %854 = vmatprep.subr.mxu0 0.0
    %855 = vmatpush1.xpose.msra.mxu0 0.0
    %856 = vmatprep.subr.mxu0 0.0
    %857 = vmatpush1.xpose.msra.mxu0 0.0
    %858 = vmatprep.subr.mxu0 0.0
    %859 = vmatpush1.xpose.msra.mxu0 0.0
    %860 = vmatprep.subr.mxu0 0.0
    %861 = vmatpush1.xpose.msra.mxu0 0.0
    %862 = vmatprep.subr.mxu0 0.0
    %863 = vmatpush1.xpose.msra.mxu0 0.0
    %864 = vmatprep.subr.mxu0 0.0
    %865 = vmatpush1.xpose.msra.mxu0 0.0
    %866 = vmatprep.subr.mxu0 0.0
    %867 = vmatpush1.xpose.msra.mxu0 0.0
    %868 = vmatprep.subr.mxu0 0.0
    %869 = vmatpush1.xpose.msra.mxu0 0.0
    %870 = vmatprep.subr.mxu0 0.0
    %871 = vmatpush1.xpose.msra.mxu0 0.0
    %872 = vmatprep.subr.mxu0 0.0
    %873 = vmatpush1.xpose.msra.mxu0 0.0
    %874 = vmatprep.subr.mxu0 0.0
    %875 = vmatpush1.xpose.msra.mxu0 0.0
    %876 = vmatprep.subr.mxu0 0.0
    %877 = vmatpush1.xpose.msra.mxu0 0.0
    %878 = vmatprep.subr.mxu0 0.0
    %879 = vmatpush1.xpose.msra.mxu0 0.0
    %880 = vmatprep.subr.mxu0 0.0
    %881 = vmatpush1.xpose.msra.mxu0 0.0
    %882 = vmatprep.subr.mxu0 0.0
    %883 = vmatpush1.xpose.msra.mxu0 0.0
    %884 = vmatprep.subr.mxu0 0.0
    %885 = vmatpush1.xpose.msra.mxu0 0.0
    %886 = vmatprep.subr.mxu0 0.0
    %887 = vmatpush1.xpose.msra.mxu0 0.0
    %888 = vmatprep.mubr.f32.mxu0 0.0
    %889 = vmatmul.mubr.f32.gmra.mrb[0].mxu0 %v820
    %v890 = vpop.f32.mrb[0].mxu0
    %v891 = vadd.f32 0.0, %v890
    %v892 = vpop.f32.mrb[0].mxu0
    %893 = vdwg.mxu0
    %v894 = vsel %vm141, %v891, -inf
    %895 = vmax.xlane.f32.xlu0 %v894
    %v896 = vpop.xlane.xlu0 %895
    %v897 = vsub.f32 %v891, %v896
    %v898 = vmul.f32 %v897, 1.442695
    %v899 = vpow.pop %v898
    %v900 = vsel %vm141, %v899, 0.0
    %901 = vadd.xlane.f32.xlu0 %v900
    %v902 = vpop.xlane.xlu0 %901
    %903 = vrot.lane.b32.xlu0 %v135, 64
    %v904 = vpop.permute.xlu0 %903
    %v907 = vsel %vm141, %v899, 0
    %909 = vmatprep.subr.mxu0 0.0
    %910 = vmatpush1.msra.mxu0 %v904
    %911 = vmatprep.subr.mxu0 0.0
    %912 = vmatpush1.msra.mxu0 0.0
    %913 = vmatprep.subr.mxu0 0.0
    %914 = vmatpush1.msra.mxu0 0.0
    %915 = vmatprep.subr.mxu0 0.0
    %916 = vmatpush1.msra.mxu0 0.0
    %917 = vmatprep.subr.mxu0 0.0
    %918 = vmatpush1.msra.mxu0 0.0
    %919 = vmatprep.subr.mxu0 0.0
    %920 = vmatpush1.msra.mxu0 0.0
    %921 = vmatprep.subr.mxu0 0.0
    %922 = vmatpush1.msra.mxu0 0.0
    %923 = vmatprep.subr.mxu0 0.0
    %924 = vmatpush1.msra.mxu0 0.0
    %925 = vmatprep.subr.mxu0 0.0
    %926 = vmatpush1.msra.mxu0 0.0
    %927 = vmatprep.subr.mxu0 0.0
    %928 = vmatpush1.msra.mxu0 0.0
    %929 = vmatprep.subr.mxu0 0.0
    %930 = vmatpush1.msra.mxu0 0.0
    %931 = vmatprep.subr.mxu0 0.0
    %932 = vmatpush1.msra.mxu0 0.0
    %933 = vmatprep.subr.mxu0 0.0
    %934 = vmatpush1.msra.mxu0 0.0
    %935 = vmatprep.subr.mxu0 0.0
    %936 = vmatpush1.msra.mxu0 0.0
    %937 = vmatprep.subr.mxu0 0.0
    %938 = vmatpush1.msra.mxu0 0.0
    %939 = vmatprep.subr.mxu0 0.0
    %940 = vmatpush1.msra.mxu0 0.0
    %941 = vmatprep.subr.mxu0 0.0
    %942 = vmatpush1.msra.mxu0 0.0
    %943 = vmatprep.subr.mxu0 0.0
    %944 = vmatpush1.msra.mxu0 0.0
    %945 = vmatprep.subr.mxu0 0.0
    %946 = vmatpush1.msra.mxu0 0.0
    %947 = vmatprep.subr.mxu0 0.0
    %948 = vmatpush1.msra.mxu0 0.0
    %949 = vmatprep.subr.mxu0 0.0
    %950 = vmatpush1.msra.mxu0 0.0
    %951 = vmatprep.subr.mxu0 0.0
    %952 = vmatpush1.msra.mxu0 0.0
    %953 = vmatprep.subr.mxu0 0.0
    %954 = vmatpush1.msra.mxu0 0.0
    %955 = vmatprep.subr.mxu0 0.0
    %956 = vmatpush1.msra.mxu0 0.0
    %957 = vmatprep.subr.mxu0 0.0
    %958 = vmatpush1.msra.mxu0 0.0
    %959 = vmatprep.subr.mxu0 0.0
    %960 = vmatpush1.msra.mxu0 0.0
    %961 = vmatprep.subr.mxu0 0.0
    %962 = vmatpush1.msra.mxu0 0.0
    %963 = vmatprep.subr.mxu0 0.0
    %964 = vmatpush1.msra.mxu0 0.0
    %965 = vmatprep.subr.mxu0 0.0
    %966 = vmatpush1.msra.mxu0 0.0
    %967 = vmatprep.subr.mxu0 0.0
    %968 = vmatpush1.msra.mxu0 0.0
    %969 = vmatprep.subr.mxu0 0.0
    %970 = vmatpush1.msra.mxu0 0.0
    %971 = vmatprep.subr.mxu0 0.0
    %972 = vmatpush1.msra.mxu0 0.0
    %973 = vmatprep.mubr.f32.mxu0 0.0
    %974 = vmatmul.mubr.f32.gmra.mrb[0].mxu0 %v907
    %v975 = vpop.f32.mrb[0].mxu0
    %v976 = vadd.f32 0.0, %v975
    %v977 = vpop.f32.mrb[0].mxu0
    %978 = vdwg.mxu0
    %v979 = vrcp.pop %v902
    %v980 = vmul.f32 %v976, %v979
    %s981 = scalar_lea.vmem [#allocation2], 8
    %982 = vst.msk [vmem:[%s981] sm:$0xff] %vm141, %v980
    %983 = vrot.lane.b32.xlu0 %v135, 120
    %v984 = vpop.permute.xlu0 %983
    %985 = vrot.lane.b32.xlu0 %v135, 88
    %v986 = vpop.permute.xlu0 %985
    %v987 = vsel %vm141, %v984, 0
    %v989 = vsel %vm141, %v986, 0
    %991 = vmatprep.subr.mxu0 0.0
    %992 = vmatpush1.xpose.msra.mxu0 %v989
    %993 = vmatprep.subr.mxu0 0.0
    %994 = vmatpush1.xpose.msra.mxu0 0.0
    %995 = vmatprep.subr.mxu0 0.0
    %996 = vmatpush1.xpose.msra.mxu0 0.0
    %997 = vmatprep.subr.mxu0 0.0
    %998 = vmatpush1.xpose.msra.mxu0 0.0
    %999 = vmatprep.subr.mxu0 0.0
    %1000 = vmatpush1.xpose.msra.mxu0 0.0
    %1001 = vmatprep.subr.mxu0 0.0
    %1002 = vmatpush1.xpose.msra.mxu0 0.0
    %1003 = vmatprep.subr.mxu0 0.0
    %1004 = vmatpush1.xpose.msra.mxu0 0.0
    %1005 = vmatprep.subr.mxu0 0.0
    %1006 = vmatpush1.xpose.msra.mxu0 0.0
    %1007 = vmatprep.subr.mxu0 0.0
    %1008 = vmatpush1.xpose.msra.mxu0 0.0
    %1009 = vmatprep.subr.mxu0 0.0
    %1010 = vmatpush1.xpose.msra.mxu0 0.0
    %1011 = vmatprep.subr.mxu0 0.0
    %1012 = vmatpush1.xpose.msra.mxu0 0.0
    %1013 = vmatprep.subr.mxu0 0.0
    %1014 = vmatpush1.xpose.msra.mxu0 0.0
    %1015 = vmatprep.subr.mxu0 0.0
    %1016 = vmatpush1.xpose.msra.mxu0 0.0
    %1017 = vmatprep.subr.mxu0 0.0
    %1018 = vmatpush1.xpose.msra.mxu0 0.0
    %1019 = vmatprep.subr.mxu0 0.0
    %1020 = vmatpush1.xpose.msra.mxu0 0.0
    %1021 = vmatprep.subr.mxu0 0.0
    %1022 = vmatpush1.xpose.msra.mxu0 0.0
    %1023 = vmatprep.subr.mxu0 0.0
    %1024 = vmatpush1.xpose.msra.mxu0 0.0
    %1025 = vmatprep.subr.mxu0 0.0
    %1026 = vmatpush1.xpose.msra.mxu0 0.0
    %1027 = vmatprep.subr.mxu0 0.0
    %1028 = vmatpush1.xpose.msra.mxu0 0.0
    %1029 = vmatprep.subr.mxu0 0.0
    %1030 = vmatpush1.xpose.msra.mxu0 0.0
    %1031 = vmatprep.subr.mxu0 0.0
    %1032 = vmatpush1.xpose.msra.mxu0 0.0
    %1033 = vmatprep.subr.mxu0 0.0
    %1034 = vmatpush1.xpose.msra.mxu0 0.0
    %1035 = vmatprep.subr.mxu0 0.0
    %1036 = vmatpush1.xpose.msra.mxu0 0.0
    %1037 = vmatprep.subr.mxu0 0.0
    %1038 = vmatpush1.xpose.msra.mxu0 0.0
    %1039 = vmatprep.subr.mxu0 0.0
    %1040 = vmatpush1.xpose.msra.mxu0 0.0
    %1041 = vmatprep.subr.mxu0 0.0
    %1042 = vmatpush1.xpose.msra.mxu0 0.0
    %1043 = vmatprep.subr.mxu0 0.0
    %1044 = vmatpush1.xpose.msra.mxu0 0.0
    %1045 = vmatprep.subr.mxu0 0.0
    %1046 = vmatpush1.xpose.msra.mxu0 0.0
    %1047 = vmatprep.subr.mxu0 0.0
    %1048 = vmatpush1.xpose.msra.mxu0 0.0
    %1049 = vmatprep.subr.mxu0 0.0
    %1050 = vmatpush1.xpose.msra.mxu0 0.0
    %1051 = vmatprep.subr.mxu0 0.0
    %1052 = vmatpush1.xpose.msra.mxu0 0.0
    %1053 = vmatprep.subr.mxu0 0.0
    %1054 = vmatpush1.xpose.msra.mxu0 0.0
    %1055 = vmatprep.mubr.f32.mxu0 0.0
    %1056 = vmatmul.mubr.f32.gmra.mrb[0].mxu0 %v987
    %v1057 = vpop.f32.mrb[0].mxu0
    %v1058 = vadd.f32 0.0, %v1057
    %v1059 = vpop.f32.mrb[0].mxu0
    %1060 = vdwg.mxu0
    %v1061 = vsel %vm141, %v1058, -inf
    %1062 = vmax.xlane.f32.xlu0 %v1061
    %v1063 = vpop.xlane.xlu0 %1062
    %v1064 = vsub.f32 %v1058, %v1063
    %v1065 = vmul.f32 %v1064, 1.442695
    %v1066 = vpow.pop %v1065
    %v1067 = vsel %vm141, %v1066, 0.0
    %1068 = vadd.xlane.f32.xlu0 %v1067
    %v1069 = vpop.xlane.xlu0 %1068
    %1070 = vrot.lane.b32.xlu0 %v135, 56
    %v1071 = vpop.permute.xlu0 %1070
    %v1074 = vsel %vm141, %v1066, 0
    %1076 = vmatprep.subr.mxu0 0.0
    %1077 = vmatpush1.msra.mxu0 %v1071
    %1078 = vmatprep.subr.mxu0 0.0
    %1079 = vmatpush1.msra.mxu0 0.0
    %1080 = vmatprep.subr.mxu0 0.0
    %1081 = vmatpush1.msra.mxu0 0.0
    %1082 = vmatprep.subr.mxu0 0.0
    %1083 = vmatpush1.msra.mxu0 0.0
    %1084 = vmatprep.subr.mxu0 0.0
    %1085 = vmatpush1.msra.mxu0 0.0
    %1086 = vmatprep.subr.mxu0 0.0
    %1087 = vmatpush1.msra.mxu0 0.0
    %1088 = vmatprep.subr.mxu0 0.0
    %1089 = vmatpush1.msra.mxu0 0.0
    %1090 = vmatprep.subr.mxu0 0.0
    %1091 = vmatpush1.msra.mxu0 0.0
    %1092 = vmatprep.subr.mxu0 0.0
    %1093 = vmatpush1.msra.mxu0 0.0
    %1094 = vmatprep.subr.mxu0 0.0
    %1095 = vmatpush1.msra.mxu0 0.0
    %1096 = vmatprep.subr.mxu0 0.0
    %1097 = vmatpush1.msra.mxu0 0.0
    %1098 = vmatprep.subr.mxu0 0.0
    %1099 = vmatpush1.msra.mxu0 0.0
    %1100 = vmatprep.subr.mxu0 0.0
    %1101 = vmatpush1.msra.mxu0 0.0
    %1102 = vmatprep.subr.mxu0 0.0
    %1103 = vmatpush1.msra.mxu0 0.0
    %1104 = vmatprep.subr.mxu0 0.0
    %1105 = vmatpush1.msra.mxu0 0.0
    %1106 = vmatprep.subr.mxu0 0.0
    %1107 = vmatpush1.msra.mxu0 0.0
    %1108 = vmatprep.subr.mxu0 0.0
    %1109 = vmatpush1.msra.mxu0 0.0
    %1110 = vmatprep.subr.mxu0 0.0
    %1111 = vmatpush1.msra.mxu0 0.0
    %1112 = vmatprep.subr.mxu0 0.0
    %1113 = vmatpush1.msra.mxu0 0.0
    %1114 = vmatprep.subr.mxu0 0.0
    %1115 = vmatpush1.msra.mxu0 0.0
    %1116 = vmatprep.subr.mxu0 0.0
    %1117 = vmatpush1.msra.mxu0 0.0
    %1118 = vmatprep.subr.mxu0 0.0
    %1119 = vmatpush1.msra.mxu0 0.0
    %1120 = vmatprep.subr.mxu0 0.0
    %1121 = vmatpush1.msra.mxu0 0.0
    %1122 = vmatprep.subr.mxu0 0.0
    %1123 = vmatpush1.msra.mxu0 0.0
    %1124 = vmatprep.subr.mxu0 0.0
    %1125 = vmatpush1.msra.mxu0 0.0
    %1126 = vmatprep.subr.mxu0 0.0
    %1127 = vmatpush1.msra.mxu0 0.0
    %1128 = vmatprep.subr.mxu0 0.0
    %1129 = vmatpush1.msra.mxu0 0.0
    %1130 = vmatprep.subr.mxu0 0.0
    %1131 = vmatpush1.msra.mxu0 0.0
    %1132 = vmatprep.subr.mxu0 0.0
    %1133 = vmatpush1.msra.mxu0 0.0
    %1134 = vmatprep.subr.mxu0 0.0
    %1135 = vmatpush1.msra.mxu0 0.0
    %1136 = vmatprep.subr.mxu0 0.0
    %1137 = vmatpush1.msra.mxu0 0.0
    %1138 = vmatprep.subr.mxu0 0.0
    %1139 = vmatpush1.msra.mxu0 0.0
    %1140 = vmatprep.mubr.f32.mxu0 0.0
    %1141 = vmatmul.mubr.f32.gmra.mrb[0].mxu0 %v1074
    %v1142 = vpop.f32.mrb[0].mxu0
    %v1143 = vadd.f32 0.0, %v1142
    %v1144 = vpop.f32.mrb[0].mxu0
    %1145 = vdwg.mxu0
    %v1146 = vrcp.pop %v1069
    %v1147 = vmul.f32 %v1143, %v1146
    %1149 = vrot.lane.b32.xlu0 %v1147, 8
    %v1150 = vpop.permute.xlu0 %1149
    %1152 = vst.msk [vmem:[%s981] sm:$0xff] %vm473, %v1150
    %1153 = vrot.lane.b32.xlu0 %v135, 112
    %v1154 = vpop.permute.xlu0 %1153
    %1155 = vrot.lane.b32.xlu0 %v135, 80
    %v1156 = vpop.permute.xlu0 %1155
    %v1157 = vsel %vm141, %v1154, 0
    %v1159 = vsel %vm141, %v1156, 0
    %1161 = vmatprep.subr.mxu0 0.0
    %1162 = vmatpush1.xpose.msra.mxu0 %v1159
    %1163 = vmatprep.subr.mxu0 0.0
    %1164 = vmatpush1.xpose.msra.mxu0 0.0
    %1165 = vmatprep.subr.mxu0 0.0
    %1166 = vmatpush1.xpose.msra.mxu0 0.0
    %1167 = vmatprep.subr.mxu0 0.0
    %1168 = vmatpush1.xpose.msra.mxu0 0.0
    %1169 = vmatprep.subr.mxu0 0.0
    %1170 = vmatpush1.xpose.msra.mxu0 0.0
    %1171 = vmatprep.subr.mxu0 0.0
    %1172 = vmatpush1.xpose.msra.mxu0 0.0
    %1173 = vmatprep.subr.mxu0 0.0
    %1174 = vmatpush1.xpose.msra.mxu0 0.0
    %1175 = vmatprep.subr.mxu0 0.0
    %1176 = vmatpush1.xpose.msra.mxu0 0.0
    %1177 = vmatprep.subr.mxu0 0.0
    %1178 = vmatpush1.xpose.msra.mxu0 0.0
    %1179 = vmatprep.subr.mxu0 0.0
    %1180 = vmatpush1.xpose.msra.mxu0 0.0
    %1181 = vmatprep.subr.mxu0 0.0
    %1182 = vmatpush1.xpose.msra.mxu0 0.0
    %1183 = vmatprep.subr.mxu0 0.0
    %1184 = vmatpush1.xpose.msra.mxu0 0.0
    %1185 = vmatprep.subr.mxu0 0.0
    %1186 = vmatpush1.xpose.msra.mxu0 0.0
    %1187 = vmatprep.subr.mxu0 0.0
    %1188 = vmatpush1.xpose.msra.mxu0 0.0
    %1189 = vmatprep.subr.mxu0 0.0
    %1190 = vmatpush1.xpose.msra.mxu0 0.0
    %1191 = vmatprep.subr.mxu0 0.0
    %1192 = vmatpush1.xpose.msra.mxu0 0.0
    %1193 = vmatprep.subr.mxu0 0.0
    %1194 = vmatpush1.xpose.msra.mxu0 0.0
    %1195 = vmatprep.subr.mxu0 0.0
    %1196 = vmatpush1.xpose.msra.mxu0 0.0
    %1197 = vmatprep.subr.mxu0 0.0
    %1198 = vmatpush1.xpose.msra.mxu0 0.0
    %1199 = vmatprep.subr.mxu0 0.0
    %1200 = vmatpush1.xpose.msra.mxu0 0.0
    %1201 = vmatprep.subr.mxu0 0.0
    %1202 = vmatpush1.xpose.msra.mxu0 0.0
    %1203 = vmatprep.subr.mxu0 0.0
    %1204 = vmatpush1.xpose.msra.mxu0 0.0
    %1205 = vmatprep.subr.mxu0 0.0
    %1206 = vmatpush1.xpose.msra.mxu0 0.0
    %1207 = vmatprep.subr.mxu0 0.0
    %1208 = vmatpush1.xpose.msra.mxu0 0.0
    %1209 = vmatprep.subr.mxu0 0.0
    %1210 = vmatpush1.xpose.msra.mxu0 0.0
    %1211 = vmatprep.subr.mxu0 0.0
    %1212 = vmatpush1.xpose.msra.mxu0 0.0
    %1213 = vmatprep.subr.mxu0 0.0
    %1214 = vmatpush1.xpose.msra.mxu0 0.0
    %1215 = vmatprep.subr.mxu0 0.0
    %1216 = vmatpush1.xpose.msra.mxu0 0.0
    %1217 = vmatprep.subr.mxu0 0.0
    %1218 = vmatpush1.xpose.msra.mxu0 0.0
    %1219 = vmatprep.subr.mxu0 0.0
    %1220 = vmatpush1.xpose.msra.mxu0 0.0
    %1221 = vmatprep.subr.mxu0 0.0
    %1222 = vmatpush1.xpose.msra.mxu0 0.0
    %1223 = vmatprep.subr.mxu0 0.0
    %1224 = vmatpush1.xpose.msra.mxu0 0.0
    %1225 = vmatprep.mubr.f32.mxu0 0.0
    %1226 = vmatmul.mubr.f32.gmra.mrb[0].mxu0 %v1157
    %v1227 = vpop.f32.mrb[0].mxu0
    %v1228 = vadd.f32 0.0, %v1227
    %v1229 = vpop.f32.mrb[0].mxu0
    %1230 = vdwg.mxu0
    %v1231 = vsel %vm141, %v1228, -inf
    %1232 = vmax.xlane.f32.xlu0 %v1231
    %v1233 = vpop.xlane.xlu0 %1232
    %v1234 = vsub.f32 %v1228, %v1233
    %v1235 = vmul.f32 %v1234, 1.442695
    %v1236 = vpow.pop %v1235
    %v1237 = vsel %vm141, %v1236, 0.0
    %1238 = vadd.xlane.f32.xlu0 %v1237
    %v1239 = vpop.xlane.xlu0 %1238
    %1240 = vrot.lane.b32.xlu0 %v135, 48
    %v1241 = vpop.permute.xlu0 %1240
    %v1244 = vsel %vm141, %v1236, 0
    %1246 = vmatprep.subr.mxu0 0.0
    %1247 = vmatpush1.msra.mxu0 %v1241
    %1248 = vmatprep.subr.mxu0 0.0
    %1249 = vmatpush1.msra.mxu0 0.0
    %1250 = vmatprep.subr.mxu0 0.0
    %1251 = vmatpush1.msra.mxu0 0.0
    %1252 = vmatprep.subr.mxu0 0.0
    %1253 = vmatpush1.msra.mxu0 0.0
    %1254 = vmatprep.subr.mxu0 0.0
    %1255 = vmatpush1.msra.mxu0 0.0
    %1256 = vmatprep.subr.mxu0 0.0
    %1257 = vmatpush1.msra.mxu0 0.0
    %1258 = vmatprep.subr.mxu0 0.0
    %1259 = vmatpush1.msra.mxu0 0.0
    %1260 = vmatprep.subr.mxu0 0.0
    %1261 = vmatpush1.msra.mxu0 0.0
    %1262 = vmatprep.subr.mxu0 0.0
    %1263 = vmatpush1.msra.mxu0 0.0
    %1264 = vmatprep.subr.mxu0 0.0
    %1265 = vmatpush1.msra.mxu0 0.0
    %1266 = vmatprep.subr.mxu0 0.0
    %1267 = vmatpush1.msra.mxu0 0.0
    %1268 = vmatprep.subr.mxu0 0.0
    %1269 = vmatpush1.msra.mxu0 0.0
    %1270 = vmatprep.subr.mxu0 0.0
    %1271 = vmatpush1.msra.mxu0 0.0
    %1272 = vmatprep.subr.mxu0 0.0
    %1273 = vmatpush1.msra.mxu0 0.0
    %1274 = vmatprep.subr.mxu0 0.0
    %1275 = vmatpush1.msra.mxu0 0.0
    %1276 = vmatprep.subr.mxu0 0.0
    %1277 = vmatpush1.msra.mxu0 0.0
    %1278 = vmatprep.subr.mxu0 0.0
    %1279 = vmatpush1.msra.mxu0 0.0
    %1280 = vmatprep.subr.mxu0 0.0
    %1281 = vmatpush1.msra.mxu0 0.0
    %1282 = vmatprep.subr.mxu0 0.0
    %1283 = vmatpush1.msra.mxu0 0.0
    %1284 = vmatprep.subr.mxu0 0.0
    %1285 = vmatpush1.msra.mxu0 0.0
    %1286 = vmatprep.subr.mxu0 0.0
    %1287 = vmatpush1.msra.mxu0 0.0
    %1288 = vmatprep.subr.mxu0 0.0
    %1289 = vmatpush1.msra.mxu0 0.0
    %1290 = vmatprep.subr.mxu0 0.0
    %1291 = vmatpush1.msra.mxu0 0.0
    %1292 = vmatprep.subr.mxu0 0.0
    %1293 = vmatpush1.msra.mxu0 0.0
    %1294 = vmatprep.subr.mxu0 0.0
    %1295 = vmatpush1.msra.mxu0 0.0
    %1296 = vmatprep.subr.mxu0 0.0
    %1297 = vmatpush1.msra.mxu0 0.0
    %1298 = vmatprep.subr.mxu0 0.0
    %1299 = vmatpush1.msra.mxu0 0.0
    %1300 = vmatprep.subr.mxu0 0.0
    %1301 = vmatpush1.msra.mxu0 0.0
    %1302 = vmatprep.subr.mxu0 0.0
    %1303 = vmatpush1.msra.mxu0 0.0
    %1304 = vmatprep.subr.mxu0 0.0
    %1305 = vmatpush1.msra.mxu0 0.0
    %1306 = vmatprep.subr.mxu0 0.0
    %1307 = vmatpush1.msra.mxu0 0.0
    %1308 = vmatprep.subr.mxu0 0.0
    %1309 = vmatpush1.msra.mxu0 0.0
    %1310 = vmatprep.mubr.f32.mxu0 0.0
    %1311 = vmatmul.mubr.f32.gmra.mrb[0].mxu0 %v1244
    %v1312 = vpop.f32.mrb[0].mxu0
    %v1313 = vadd.f32 0.0, %v1312
    %v1314 = vpop.f32.mrb[0].mxu0
    %1315 = vdwg.mxu0
    %v1316 = vrcp.pop %v1239
    %v1317 = vmul.f32 %v1313, %v1316
    %1319 = vrot.lane.b32.xlu0 %v1317, 16
    %v1320 = vpop.permute.xlu0 %1319
    %1322 = vst.msk [vmem:[%s981] sm:$0xff] %vm644, %v1320
    %1323 = vrot.lane.b32.xlu0 %v135, 104
    %v1324 = vpop.permute.xlu0 %1323
    %1325 = vrot.lane.b32.xlu0 %v135, 72
    %v1326 = vpop.permute.xlu0 %1325
    %v1327 = vsel %vm141, %v1324, 0
    %v1329 = vsel %vm141, %v1326, 0
    %1331 = vmatprep.subr.mxu0 0.0
    %1332 = vmatpush1.xpose.msra.mxu0 %v1329
    %1333 = vmatprep.subr.mxu0 0.0
    %1334 = vmatpush1.xpose.msra.mxu0 0.0
    %1335 = vmatprep.subr.mxu0 0.0
    %1336 = vmatpush1.xpose.msra.mxu0 0.0
    %1337 = vmatprep.subr.mxu0 0.0
    %1338 = vmatpush1.xpose.msra.mxu0 0.0
    %1339 = vmatprep.subr.mxu0 0.0
    %1340 = vmatpush1.xpose.msra.mxu0 0.0
    %1341 = vmatprep.subr.mxu0 0.0
    %1342 = vmatpush1.xpose.msra.mxu0 0.0
    %1343 = vmatprep.subr.mxu0 0.0
    %1344 = vmatpush1.xpose.msra.mxu0 0.0
    %1345 = vmatprep.subr.mxu0 0.0
    %1346 = vmatpush1.xpose.msra.mxu0 0.0
    %1347 = vmatprep.subr.mxu0 0.0
    %1348 = vmatpush1.xpose.msra.mxu0 0.0
    %1349 = vmatprep.subr.mxu0 0.0
    %1350 = vmatpush1.xpose.msra.mxu0 0.0
    %1351 = vmatprep.subr.mxu0 0.0
    %1352 = vmatpush1.xpose.msra.mxu0 0.0
    %1353 = vmatprep.subr.mxu0 0.0
    %1354 = vmatpush1.xpose.msra.mxu0 0.0
    %1355 = vmatprep.subr.mxu0 0.0
    %1356 = vmatpush1.xpose.msra.mxu0 0.0
    %1357 = vmatprep.subr.mxu0 0.0
    %1358 = vmatpush1.xpose.msra.mxu0 0.0
    %1359 = vmatprep.subr.mxu0 0.0
    %1360 = vmatpush1.xpose.msra.mxu0 0.0
    %1361 = vmatprep.subr.mxu0 0.0
    %1362 = vmatpush1.xpose.msra.mxu0 0.0
    %1363 = vmatprep.subr.mxu0 0.0
    %1364 = vmatpush1.xpose.msra.mxu0 0.0
    %1365 = vmatprep.subr.mxu0 0.0
    %1366 = vmatpush1.xpose.msra.mxu0 0.0
    %1367 = vmatprep.subr.mxu0 0.0
    %1368 = vmatpush1.xpose.msra.mxu0 0.0
    %1369 = vmatprep.subr.mxu0 0.0
    %1370 = vmatpush1.xpose.msra.mxu0 0.0
    %1371 = vmatprep.subr.mxu0 0.0
    %1372 = vmatpush1.xpose.msra.mxu0 0.0
    %1373 = vmatprep.subr.mxu0 0.0
    %1374 = vmatpush1.xpose.msra.mxu0 0.0
    %1375 = vmatprep.subr.mxu0 0.0
    %1376 = vmatpush1.xpose.msra.mxu0 0.0
    %1377 = vmatprep.subr.mxu0 0.0
    %1378 = vmatpush1.xpose.msra.mxu0 0.0
    %1379 = vmatprep.subr.mxu0 0.0
    %1380 = vmatpush1.xpose.msra.mxu0 0.0
    %1381 = vmatprep.subr.mxu0 0.0
    %1382 = vmatpush1.xpose.msra.mxu0 0.0
    %1383 = vmatprep.subr.mxu0 0.0
    %1384 = vmatpush1.xpose.msra.mxu0 0.0
    %1385 = vmatprep.subr.mxu0 0.0
    %1386 = vmatpush1.xpose.msra.mxu0 0.0
    %1387 = vmatprep.subr.mxu0 0.0
    %1388 = vmatpush1.xpose.msra.mxu0 0.0
    %1389 = vmatprep.subr.mxu0 0.0
    %1390 = vmatpush1.xpose.msra.mxu0 0.0
    %1391 = vmatprep.subr.mxu0 0.0
    %1392 = vmatpush1.xpose.msra.mxu0 0.0
    %1393 = vmatprep.subr.mxu0 0.0
    %1394 = vmatpush1.xpose.msra.mxu0 0.0
    %1395 = vmatprep.mubr.f32.mxu0 0.0
    %1396 = vmatmul.mubr.f32.gmra.mrb[0].mxu0 %v1327
    %v1397 = vpop.f32.mrb[0].mxu0
    %v1398 = vadd.f32 0.0, %v1397
    %v1399 = vpop.f32.mrb[0].mxu0
    %1400 = vdwg.mxu0
    %v1401 = vsel %vm141, %v1398, -inf
    %1402 = vmax.xlane.f32.xlu0 %v1401
    %v1403 = vpop.xlane.xlu0 %1402
    %v1404 = vsub.f32 %v1398, %v1403
    %v1405 = vmul.f32 %v1404, 1.442695
    %v1406 = vpow.pop %v1405
    %v1407 = vsel %vm141, %v1406, 0.0
    %1408 = vadd.xlane.f32.xlu0 %v1407
    %v1409 = vpop.xlane.xlu0 %1408
    %1410 = vrot.lane.b32.xlu0 %v135, 40
    %v1411 = vpop.permute.xlu0 %1410
    %v1414 = vsel %vm141, %v1406, 0
    %1416 = vmatprep.subr.mxu0 0.0
    %1417 = vmatpush1.msra.mxu0 %v1411
    %1418 = vmatprep.subr.mxu0 0.0
    %1419 = vmatpush1.msra.mxu0 0.0
    %1420 = vmatprep.subr.mxu0 0.0
    %1421 = vmatpush1.msra.mxu0 0.0
    %1422 = vmatprep.subr.mxu0 0.0
    %1423 = vmatpush1.msra.mxu0 0.0
    %1424 = vmatprep.subr.mxu0 0.0
    %1425 = vmatpush1.msra.mxu0 0.0
    %1426 = vmatprep.subr.mxu0 0.0
    %1427 = vmatpush1.msra.mxu0 0.0
    %1428 = vmatprep.subr.mxu0 0.0
    %1429 = vmatpush1.msra.mxu0 0.0
    %1430 = vmatprep.subr.mxu0 0.0
    %1431 = vmatpush1.msra.mxu0 0.0
    %1432 = vmatprep.subr.mxu0 0.0
    %1433 = vmatpush1.msra.mxu0 0.0
    %1434 = vmatprep.subr.mxu0 0.0
    %1435 = vmatpush1.msra.mxu0 0.0
    %1436 = vmatprep.subr.mxu0 0.0
    %1437 = vmatpush1.msra.mxu0 0.0
    %1438 = vmatprep.subr.mxu0 0.0
    %1439 = vmatpush1.msra.mxu0 0.0
    %1440 = vmatprep.subr.mxu0 0.0
    %1441 = vmatpush1.msra.mxu0 0.0
    %1442 = vmatprep.subr.mxu0 0.0
    %1443 = vmatpush1.msra.mxu0 0.0
    %1444 = vmatprep.subr.mxu0 0.0
    %1445 = vmatpush1.msra.mxu0 0.0
    %1446 = vmatprep.subr.mxu0 0.0
    %1447 = vmatpush1.msra.mxu0 0.0
    %1448 = vmatprep.subr.mxu0 0.0
    %1449 = vmatpush1.msra.mxu0 0.0
    %1450 = vmatprep.subr.mxu0 0.0
    %1451 = vmatpush1.msra.mxu0 0.0
    %1452 = vmatprep.subr.mxu0 0.0
    %1453 = vmatpush1.msra.mxu0 0.0
    %1454 = vmatprep.subr.mxu0 0.0
    %1455 = vmatpush1.msra.mxu0 0.0
    %1456 = vmatprep.subr.mxu0 0.0
    %1457 = vmatpush1.msra.mxu0 0.0
    %1458 = vmatprep.subr.mxu0 0.0
    %1459 = vmatpush1.msra.mxu0 0.0
    %1460 = vmatprep.subr.mxu0 0.0
    %1461 = vmatpush1.msra.mxu0 0.0
    %1462 = vmatprep.subr.mxu0 0.0
    %1463 = vmatpush1.msra.mxu0 0.0
    %1464 = vmatprep.subr.mxu0 0.0
    %1465 = vmatpush1.msra.mxu0 0.0
    %1466 = vmatprep.subr.mxu0 0.0
    %1467 = vmatpush1.msra.mxu0 0.0
    %1468 = vmatprep.subr.mxu0 0.0
    %1469 = vmatpush1.msra.mxu0 0.0
    %1470 = vmatprep.subr.mxu0 0.0
    %1471 = vmatpush1.msra.mxu0 0.0
    %1472 = vmatprep.subr.mxu0 0.0
    %1473 = vmatpush1.msra.mxu0 0.0
    %1474 = vmatprep.subr.mxu0 0.0
    %1475 = vmatpush1.msra.mxu0 0.0
    %1476 = vmatprep.subr.mxu0 0.0
    %1477 = vmatpush1.msra.mxu0 0.0
    %1478 = vmatprep.subr.mxu0 0.0
    %1479 = vmatpush1.msra.mxu0 0.0
    %1480 = vmatprep.mubr.f32.mxu0 0.0
    %1481 = vmatmul.mubr.f32.gmra.mrb[0].mxu0 %v1414
    %v1482 = vpop.f32.mrb[0].mxu0
    %v1483 = vadd.f32 0.0, %v1482
    %v1484 = vpop.f32.mrb[0].mxu0
    %1485 = vdwg.mxu0
    %v1486 = vrcp.pop %v1409
    %v1487 = vmul.f32 %v1483, %v1486
    %1489 = vrot.lane.b32.xlu0 %v1487, 24
    %v1490 = vpop.permute.xlu0 %1489
    %1492 = vst.msk [vmem:[%s981] sm:$0xff] %vm815, %v1490
    %v1493 = vld [vmem:[#allocation2] sm:$0xff]
    %v1494 = vld [vmem:[#allocation2 + $0x8] sm:$0xff]
    %1495 = vst.msk [vmem:[#allocation8] sm:$0xff] %vm56, %v1493
    %1496 = vst.msk [vmem:[#allocation8 + $0x8] sm:$0xff] %vm56, %v1494
    // Predicated region
    $region22: #{tpu_custom_call.1} parent=1 // pred_check
      _
    $region23: #{tpu_custom_call.1} parent=1 // pred_check_branch
      %1498 = sbr.rel (0) target = $region25
    $region24: #{tpu_custom_call.1} parent=1 // pred_region
      %s1500 = ssub.s32 256, 256
      %1501 = vsyncadd [#allocation5], %s1500
      %s1502 = sshll.u32 [#allocation8], 4
      %s1503 = int_to_ptr.vmem [resolvable:$true] %s1502
      %1508 = dma.vmem_to_hbm [thread:$0]  %s1503, 256, %s3, [#allocation5], 128, 128, 8
    $region25: #{tpu_custom_call.1} parent=1 // pred_fallthru
      _
    // Predicated region
    $region26: #{tpu_custom_call.1} parent=1 // pred_check
      _
    $region27: #{tpu_custom_call.1} parent=1 // pred_check_branch
      %1510 = sbr.rel (0) target = $region29
    $region28: #{tpu_custom_call.1} parent=1 // pred_region
      %1511 = dma.done [#allocation5], 256
    $region29: #{tpu_custom_call.1} parent=1 // pred_fallthru
      _
    %1512 = vsyncpa [#allocation4], 1
    %1513 = vsyncpa [#allocation7], 1
    %1514 = vsyncpa [#allocation5], 1

</llo_original>
